<compile_context>
chip_gen: v7x
topology: tpu7x:2x2x1
jax: 0.10.0
libtpu: 0.0.40
codegen_flags: <defaults>
</compile_context>

<pallas_src>
import functools

import jax
import jax.numpy as jnp
from jax import lax
from jax.experimental import pallas as pl
from jax.experimental.pallas import tpu as pltpu

# bf16 MXU operands: ~3-4x MXU throughput on v5e/v6e/v7x, half the weight/basis VMEM.
# Accumulation stays f32 (preferred_element_type), LayerNorm statistics stay f32.
MXU_DTYPE = jnp.bfloat16

# Optional: replace erf (long VALU polynomial) with a tanh approximation that runs on
# the otherwise-idle EUP. Off by default to stay faithful to the reference numerics.
USE_TANH_QUANTILE = False

_TILE_B_MAX = 512                 # amortizes per-grid-step overhead, still tiny in VMEM
_VMEM_BUDGET_BYTES = 20 * 1024 * 1024   # per-tile working-set target (safe on v7x too)
_VMEM_LIMIT_BYTES = 48 * 1024 * 1024    # raise the scoped-VMEM cap (v5e default: 16 MiB)
_LN_EPS = 1e-5                    # matches torch.nn.LayerNorm default
_INV_SQRT2 = 0.7071067811865476
_SQRT_2_OVER_PI = 0.7978845608028654


def _round_up(n: int, m: int) -> int:
    return (n + m - 1) // m * m


# -----------------------------------------------------------------------------
# One LayerNorm + quantile map + Legendre lift + accumulated MXU dots
# -----------------------------------------------------------------------------
def _block(x, g_ref, b_ref, w_ref, c_ref, n_real: int, degree: int):
    # x      : (tile_b, n_cols) f32; padded lanes (cols >= n_real) are exactly 0
    # g/b    : (1, n_cols) f32, zero on padded lanes
    # w_ref  : (degree, n_cols, n_out) bf16, zero rows for padded input lanes,
    #          zero cols for padded output lanes
    # c_ref  : (1, n_out) f32 folded P_0 bias, zero on padded output lanes

    # --- LayerNorm over the REAL feature count; no masks/iota needed because the
    #     padded lanes of x are exactly zero (they contribute 0 to both sums). ---
    inv_n = jnp.float32(1.0 / n_real)
    mean = jnp.sum(x, axis=-1, keepdims=True) * inv_n
    ex2 = jnp.sum(x * x, axis=-1, keepdims=True) * inv_n
    var = jnp.maximum(ex2 - mean * mean, 0.0)          # clamp cancellation noise
    xn = (x - mean) * lax.rsqrt(var + jnp.float32(_LN_EPS))
    xn = xn * g_ref[...] + b_ref[...]                   # padded lanes -> 0 (gamma/beta = 0)

    # --- quantile map to [-1, 1]: 2*Phi(x) - 1 = erf(x / sqrt(2)) ----------------
    if USE_TANH_QUANTILE:
        # EUP tanh approximation of the normal CDF (GELU-style), ~1e-3 abs error.
        z = jnp.tanh(jnp.float32(_SQRT_2_OVER_PI) * (xn + jnp.float32(0.044715) * xn * xn * xn))
    else:
        z = lax.erf(xn * jnp.float32(_INV_SQRT2))

    # --- Legendre recurrence with per-degree accumulated dots --------------------
    #   k*P_k = (2k-1) z P_{k-1} - (k-1) P_{k-2}
    # The MXU push for degree k overlaps the VALU recurrence for degree k+1;
    # no (tile_b, degree*n_cols) concat buffer is materialized.
    acc = jnp.dot(z.astype(w_ref.dtype), w_ref[0],
                  preferred_element_type=jnp.float32)
    p_prev, p_cur = jnp.ones_like(z), z
    for k in range(2, degree + 1):
        p_next = ((2.0 * k - 1.0) * z * p_cur
                  - (k - 1.0) * p_prev) * jnp.float32(1.0 / k)
        acc = acc + jnp.dot(p_next.astype(w_ref.dtype), w_ref[k - 1],
                            preferred_element_type=jnp.float32)
        p_prev, p_cur = p_cur, p_next

    # P_0 == 1  =>  its contribution is the precomputed constant bias c.
    return acc + c_ref[...]


# -----------------------------------------------------------------------------
# Fused kernel: 3 x (LayerNorm + quantile map + Legendre lift + matmuls)
# -----------------------------------------------------------------------------
def _qkal_fused_kernel(x_ref,
                       g0_ref, b0_ref, w1_ref, c1_ref,
                       g1_ref, b1_ref, w2_ref, c2_ref,
                       g2_ref, b2_ref, w3_ref, c3_ref,
                       o_ref, *, degree: int, n_feats):
    h = x_ref[...]                                                    # (tile_b, in_dim) f32
    h = _block(h, g0_ref, b0_ref, w1_ref, c1_ref, n_feats[0], degree)  # ln0 + l1
    h = _block(h, g1_ref, b1_ref, w2_ref, c2_ref, n_feats[1], degree)  # ln1 + l2
    h = _block(h, g2_ref, b2_ref, w3_ref, c3_ref, n_feats[2], degree)  # ln2 + l3
    o_ref[...] = h.astype(o_ref.dtype)


# -----------------------------------------------------------------------------
# Wrapper: layout plumbing (padding / coefficient packing) + pallas_call
# -----------------------------------------------------------------------------
def _pack_layer(gamma, beta, coeffs, in_pad, out_pad):
    """Pad LN params to in_pad lanes; pack Legendre coeffs P_1..P_deg as
    (degree, in_pad, out_pad) bf16 with zero rows/cols for padded features;
    fold the constant P_0 term into a bias (1, out_pad)."""
    deg_p1, in_dim, out_dim = coeffs.shape
    g = jnp.pad(gamma.astype(jnp.float32), (0, in_pad - in_dim)).reshape(1, in_pad)
    b = jnp.pad(beta.astype(jnp.float32), (0, in_pad - in_dim)).reshape(1, in_pad)
    w = jnp.pad(coeffs[1:].astype(jnp.float32),
                ((0, 0), (0, in_pad - in_dim), (0, out_pad - out_dim))).astype(MXU_DTYPE)
    # P_0 == 1  =>  its contribution is a constant bias: sum_i coeffs[0, i, :]
    c = jnp.pad(coeffs[0].sum(axis=0).astype(jnp.float32),
                (0, out_pad - out_dim)).reshape(1, out_pad)
    return g, b, w, c


def _choose_tiling(B, in_dim, hid_pad, out_pad, degree):
    """Pick (tile_b, n_tiles): big tiles to amortize grid-step overhead, bounded by an
    explicit per-tile VMEM budget, minimal batch-tail waste, and >= 2 grid steps when
    B allows so the parallel grid axis shards across both v7x TensorCores."""
    del degree  # working set dominated by a handful of full-width temporaries

    def footprint(tb):
        max_n = max(in_dim, hid_pad, out_pad)
        stream = 2 * 4 * tb * (in_dim + out_pad)      # double-buffered streamed in/out
        work = 4 * tb * (6 * max_n + 2 * out_pad)     # z, recurrence terms, acc, slack
        return stream + work

    n_tiles = max(1, -(-B // _TILE_B_MAX))
    if n_tiles == 1 and B > 8:
        n_tiles = 2                                   # keep both v7x TCs busy
    tile_b = _round_up(-(-B // n_tiles), 8)
    while footprint(tile_b) > _VMEM_BUDGET_BYTES and tile_b > 8:
        n_tiles += 1
        tile_b = _round_up(-(-B // n_tiles), 8)
    return tile_b, n_tiles


def _qkal_fused_call(x_p, layer_params, *, degree, n_feats, tile_b):
    b_pad, in_dim = x_p.shape
    out_pad = layer_params[-1][3].shape[-1]
    grid = (b_pad // tile_b,)

    def resident(shape):
        nd = len(shape)
        return pl.BlockSpec(shape, lambda i, _nd=nd: (0,) * _nd)

    # Streamed input: raw (tile_b, in_dim) tile — full-extent last dim, no lane pad.
    in_specs = [pl.BlockSpec((tile_b, in_dim), lambda i: (i, 0))]
    flat_params = []
    for (g, b, w, c) in layer_params:
        for p in (g, b, w, c):
            in_specs.append(resident(p.shape))
            flat_params.append(p)

    kernel = functools.partial(_qkal_fused_kernel, degree=degree, n_feats=n_feats)
    return pl.pallas_call(
        kernel,
        out_shape=jax.ShapeDtypeStruct((b_pad, out_pad), jnp.float32),
        grid=grid,
        in_specs=in_specs,
        out_specs=pl.BlockSpec((tile_b, out_pad), lambda i: (i, 0)),
        compiler_params=pltpu.CompilerParams(
            dimension_semantics=("parallel",),        # shards batch tiles across TCs
            vmem_limit_bytes=_VMEM_LIMIT_BYTES),
    )(x_p, *flat_params)


# -----------------------------------------------------------------------------
# Full QKAL model (forward only)
# -----------------------------------------------------------------------------
def init_qkal_params(key, *, degree, in_dim, hidden_dim, n_classes):
    """Deterministic parameter init (LayerNorm: ones/zeros; coeffs: normal)."""
    k1, k2, k3 = jax.random.split(key, 3)

    def coeff(k, fan_in, fan_out):
        std = 1.0 / (fan_in * (degree + 1))
        return std * jax.random.normal(k, (degree + 1, fan_in, fan_out),
                                       dtype=jnp.float32)

    return {
        "ln0_g": jnp.ones((in_dim,), jnp.float32),
        "ln0_b": jnp.zeros((in_dim,), jnp.float32),
        "w1": coeff(k1, in_dim, hidden_dim),
        "ln1_g": jnp.ones((hidden_dim,), jnp.float32),
        "ln1_b": jnp.zeros((hidden_dim,), jnp.float32),
        "w2": coeff(k2, hidden_dim, hidden_dim),
        "ln2_g": jnp.ones((hidden_dim,), jnp.float32),
        "ln2_b": jnp.zeros((hidden_dim,), jnp.float32),
        "w3": coeff(k3, hidden_dim, n_classes),
    }


@jax.jit
def qkal_forward(params, x):
    # Flatten any >2-D input (NCHW image) to (B, in_dim) — plain-JAX glue,
    # matches `x.view(x.size(0), -1)`.
    if x.ndim > 2:
        x = x.reshape(x.shape[0], -1)
    x = x.astype(jnp.float32)

    B, in_dim = x.shape
    hidden = params["w2"].shape[1]
    n_classes = params["w3"].shape[2]
    degree = params["w1"].shape[0] - 1
    assert degree >= 1, "QKAL kernel requires degree >= 1"

    # Hidden / output feature dims lane-padded to multiples of 128 (lane-dense stores,
    # full MXU N). The input feature dim is NOT padded — the first block handles it.
    hid_pad = _round_up(hidden, 128)
    out_pad = _round_up(n_classes, 128)

    tile_b, n_tiles = _choose_tiling(B, in_dim, hid_pad, out_pad, degree)
    b_pad = tile_b * n_tiles
    if b_pad != B:                                   # row-only pad (no lane pad)
        x = jnp.pad(x, ((0, b_pad - B), (0, 0)))

    layer_params = [
        _pack_layer(params["ln0_g"], params["ln0_b"], params["w1"], in_dim, hid_pad),
        _pack_layer(params["ln1_g"], params["ln1_b"], params["w2"], hid_pad, hid_pad),
        _pack_layer(params["ln2_g"], params["ln2_b"], params["w3"], hid_pad, out_pad),
    ]

    out = _qkal_fused_call(x, layer_params, degree=degree,
                           n_feats=(in_dim, hidden, hidden), tile_b=tile_b)
    return out[:B, :n_classes]


# -----------------------------------------------------------------------------
if __name__ == "__main__":
    # Small shapes consistent with the module: images (B, C, H, W) flattened to
    # in_dim = C*H*W, two hidden QKAL blocks, 10-class head.
    B, C, H, W = 8, 1, 8, 8
    IN_DIM = C * H * W          # 64
    HIDDEN = 32                 # padded to 128 inside the kernel
    N_CLASSES = 10              # padded to 128 inside the kernel
    DEGREE = 3

    key = jax.random.PRNGKey(0)
    kx, kp = jax.random.split(key)
    x = jax.random.normal(kx, (B, C, H, W), dtype=jnp.float32)
    params = init_qkal_params(kp, degree=DEGREE, in_dim=IN_DIM,
                              hidden_dim=HIDDEN, n_classes=N_CLASSES)

    out = qkal_forward(params, x)
    out = jax.block_until_ready(out)

    assert out.shape == (B, N_CLASSES), out.shape
    assert bool(jnp.all(jnp.isfinite(out)))
    print("KERNEL_OK")
</pallas_src>

<mosaic_0001>
module attributes {stable_mosaic.version = 11 : i64} {
  func.func @_qkal_fused_kernel(%arg0: i32, %arg1: memref<8x64xf32, #tpu.memory_space<vmem>>, %arg2: memref<1x64xf32, #tpu.memory_space<vmem>>, %arg3: memref<1x64xf32, #tpu.memory_space<vmem>>, %arg4: memref<3x64x128xbf16, #tpu.memory_space<vmem>>, %arg5: memref<1x128xf32, #tpu.memory_space<vmem>>, %arg6: memref<1x128xf32, #tpu.memory_space<vmem>>, %arg7: memref<1x128xf32, #tpu.memory_space<vmem>>, %arg8: memref<3x128x128xbf16, #tpu.memory_space<vmem>>, %arg9: memref<1x128xf32, #tpu.memory_space<vmem>>, %arg10: memref<1x128xf32, #tpu.memory_space<vmem>>, %arg11: memref<1x128xf32, #tpu.memory_space<vmem>>, %arg12: memref<3x128x128xbf16, #tpu.memory_space<vmem>>, %arg13: memref<1x128xf32, #tpu.memory_space<vmem>>, %arg14: memref<8x128xf32, #tpu.memory_space<vmem>>) attributes {dimension_semantics = [#tpu.dimension_semantics<parallel>], iteration_bounds = array<i64: 1>, scalar_prefetch = 0 : i64, scratch_operands = 0 : i64, tpu.core_type = #tpu.core_type<tc>, window_params = [{transform_indices = @transform_0, window_bounds = array<i64: 8, 64>}, {pipeline_mode = #tpu.pipeline_mode<synchronous>, transform_indices = @transform_1, window_bounds = array<i64: 1, 64>}, {pipeline_mode = #tpu.pipeline_mode<synchronous>, transform_indices = @transform_2, window_bounds = array<i64: 1, 64>}, {pipeline_mode = #tpu.pipeline_mode<synchronous>, transform_indices = @transform_3, window_bounds = array<i64: 3, 64, 128>}, {pipeline_mode = #tpu.pipeline_mode<synchronous>, transform_indices = @transform_4, window_bounds = array<i64: 1, 128>}, {pipeline_mode = #tpu.pipeline_mode<synchronous>, transform_indices = @transform_5, window_bounds = array<i64: 1, 128>}, {pipeline_mode = #tpu.pipeline_mode<synchronous>, transform_indices = @transform_6, window_bounds = array<i64: 1, 128>}, {pipeline_mode = #tpu.pipeline_mode<synchronous>, transform_indices = @transform_7, window_bounds = array<i64: 3, 128, 128>}, {pipeline_mode = #tpu.pipeline_mode<synchronous>, transform_indices = @transform_8, window_bounds = array<i64: 1, 128>}, {pipeline_mode = #tpu.pipeline_mode<synchronous>, transform_indices = @transform_9, window_bounds = array<i64: 1, 128>}, {pipeline_mode = #tpu.pipeline_mode<synchronous>, transform_indices = @transform_10, window_bounds = array<i64: 1, 128>}, {pipeline_mode = #tpu.pipeline_mode<synchronous>, transform_indices = @transform_11, window_bounds = array<i64: 3, 128, 128>}, {pipeline_mode = #tpu.pipeline_mode<synchronous>, transform_indices = @transform_12, window_bounds = array<i64: 1, 128>}, {transform_indices = @transform_13, window_bounds = array<i64: 8, 128>}]} {
    %c0 = arith.constant 0 : index
    %c0_0 = arith.constant 0 : index
    %0 = vector.load %arg1[%c0, %c0_0] : memref<8x64xf32, #tpu.memory_space<vmem>>, vector<8x64xf32>
    %cst = arith.constant dense<0.000000e+00> : vector<8xf32>
    %1 = vector.multi_reduction <add>, %0, %cst [1] : vector<8x64xf32> to vector<8xf32>
    %2 = vector.shape_cast %1 : vector<8xf32> to vector<8x1xf32>
    %cst_1 = arith.constant 1.562500e-02 : f32
    %3 = vector.broadcast %cst_1 : f32 to vector<8x1xf32>
    %4 = arith.mulf %2, %3 : vector<8x1xf32>
    %5 = arith.mulf %0, %0 : vector<8x64xf32>
    %cst_2 = arith.constant dense<0.000000e+00> : vector<8xf32>
    %6 = vector.multi_reduction <add>, %5, %cst_2 [1] : vector<8x64xf32> to vector<8xf32>
    %7 = vector.shape_cast %6 : vector<8xf32> to vector<8x1xf32>
    %cst_3 = arith.constant 1.562500e-02 : f32
    %8 = vector.broadcast %cst_3 : f32 to vector<8x1xf32>
    %9 = arith.mulf %7, %8 : vector<8x1xf32>
    %10 = arith.mulf %4, %4 : vector<8x1xf32>
    %11 = arith.subf %9, %10 : vector<8x1xf32>
    %cst_4 = arith.constant 0.000000e+00 : f32
    %12 = vector.broadcast %cst_4 : f32 to vector<8x1xf32>
    %13 = arith.maximumf %11, %12 : vector<8x1xf32>
    %14 = vector.broadcast %4 : vector<8x1xf32> to vector<8x64xf32>
    %15 = arith.subf %0, %14 : vector<8x64xf32>
    %cst_5 = arith.constant 9.99999974E-6 : f32
    %16 = vector.broadcast %cst_5 : f32 to vector<8x1xf32>
    %17 = arith.addf %13, %16 : vector<8x1xf32>
    %18 = math.rsqrt %17 : vector<8x1xf32>
    %19 = vector.broadcast %18 : vector<8x1xf32> to vector<8x64xf32>
    %20 = arith.mulf %15, %19 : vector<8x64xf32>
    %c0_6 = arith.constant 0 : index
    %c0_7 = arith.constant 0 : index
    %21 = vector.load %arg2[%c0_6, %c0_7] : memref<1x64xf32, #tpu.memory_space<vmem>>, vector<1x64xf32>
    %22 = vector.broadcast %21 : vector<1x64xf32> to vector<8x64xf32>
    %23 = arith.mulf %20, %22 : vector<8x64xf32>
    %c0_8 = arith.constant 0 : index
    %c0_9 = arith.constant 0 : index
    %24 = vector.load %arg3[%c0_8, %c0_9] : memref<1x64xf32, #tpu.memory_space<vmem>>, vector<1x64xf32>
    %25 = vector.broadcast %24 : vector<1x64xf32> to vector<8x64xf32>
    %26 = arith.addf %23, %25 : vector<8x64xf32>
    %cst_10 = arith.constant 0.707106769 : f32
    %27 = vector.broadcast %cst_10 : f32 to vector<8x64xf32>
    %28 = arith.mulf %26, %27 : vector<8x64xf32>
    %29 = math.erf %28 : vector<8x64xf32>
    %30 = arith.truncf %29 : vector<8x64xf32> to vector<8x64xbf16>
    %c0_11 = arith.constant 0 : index
    %c0_12 = arith.constant 0 : index
    %c0_13 = arith.constant 0 : index
    %31 = vector.load %arg4[%c0_11, %c0_12, %c0_13] : memref<3x64x128xbf16, #tpu.memory_space<vmem>>, vector<1x64x128xbf16>
    %32 = vector.shape_cast %31 : vector<1x64x128xbf16> to vector<64x128xbf16>
    %cst_14 = arith.constant dense<0.000000e+00> : vector<8x128xf32>
    %33 = tpu.matmul %30, %32, %cst_14 {dimension_numbers = #tpu.dot_dimension_numbers<[1], [0], [0], [1], [0, 0, 1, 1], [], []>} : vector<8x64xbf16>, vector<64x128xbf16>, vector<8x128xf32> -> vector<8x128xf32>
    %cst_15 = arith.constant 1.000000e+00 : f32
    %34 = vector.broadcast %cst_15 : f32 to vector<8x64xf32>
    %cst_16 = arith.constant 3.000000e+00 : f32
    %35 = vector.broadcast %cst_16 : f32 to vector<8x64xf32>
    %36 = arith.mulf %35, %29 : vector<8x64xf32>
    %37 = arith.mulf %36, %29 : vector<8x64xf32>
    %cst_17 = arith.constant 1.000000e+00 : f32
    %38 = vector.broadcast %cst_17 : f32 to vector<8x64xf32>
    %39 = arith.mulf %38, %34 : vector<8x64xf32>
    %40 = arith.subf %37, %39 : vector<8x64xf32>
    %cst_18 = arith.constant 5.000000e-01 : f32
    %41 = vector.broadcast %cst_18 : f32 to vector<8x64xf32>
    %42 = arith.mulf %40, %41 : vector<8x64xf32>
    %43 = arith.truncf %42 : vector<8x64xf32> to vector<8x64xbf16>
    %c1 = arith.constant 1 : index
    %c0_19 = arith.constant 0 : index
    %c0_20 = arith.constant 0 : index
    %44 = vector.load %arg4[%c1, %c0_19, %c0_20] : memref<3x64x128xbf16, #tpu.memory_space<vmem>>, vector<1x64x128xbf16>
    %45 = vector.shape_cast %44 : vector<1x64x128xbf16> to vector<64x128xbf16>
    %cst_21 = arith.constant dense<0.000000e+00> : vector<8x128xf32>
    %46 = tpu.matmul %43, %45, %cst_21 {dimension_numbers = #tpu.dot_dimension_numbers<[1], [0], [0], [1], [0, 0, 1, 1], [], []>} : vector<8x64xbf16>, vector<64x128xbf16>, vector<8x128xf32> -> vector<8x128xf32>
    %47 = arith.addf %33, %46 : vector<8x128xf32>
    %cst_22 = arith.constant 5.000000e+00 : f32
    %48 = vector.broadcast %cst_22 : f32 to vector<8x64xf32>
    %49 = arith.mulf %48, %29 : vector<8x64xf32>
    %50 = arith.mulf %49, %42 : vector<8x64xf32>
    %cst_23 = arith.constant 2.000000e+00 : f32
    %51 = vector.broadcast %cst_23 : f32 to vector<8x64xf32>
    %52 = arith.mulf %51, %29 : vector<8x64xf32>
    %53 = arith.subf %50, %52 : vector<8x64xf32>
    %cst_24 = arith.constant 0.333333343 : f32
    %54 = vector.broadcast %cst_24 : f32 to vector<8x64xf32>
    %55 = arith.mulf %53, %54 : vector<8x64xf32>
    %56 = arith.truncf %55 : vector<8x64xf32> to vector<8x64xbf16>
    %c2 = arith.constant 2 : index
    %c0_25 = arith.constant 0 : index
    %c0_26 = arith.constant 0 : index
    %57 = vector.load %arg4[%c2, %c0_25, %c0_26] : memref<3x64x128xbf16, #tpu.memory_space<vmem>>, vector<1x64x128xbf16>
    %58 = vector.shape_cast %57 : vector<1x64x128xbf16> to vector<64x128xbf16>
    %cst_27 = arith.constant dense<0.000000e+00> : vector<8x128xf32>
    %59 = tpu.matmul %56, %58, %cst_27 {dimension_numbers = #tpu.dot_dimension_numbers<[1], [0], [0], [1], [0, 0, 1, 1], [], []>} : vector<8x64xbf16>, vector<64x128xbf16>, vector<8x128xf32> -> vector<8x128xf32>
    %60 = arith.addf %47, %59 : vector<8x128xf32>
    %c0_28 = arith.constant 0 : index
    %c0_29 = arith.constant 0 : index
    %61 = vector.load %arg5[%c0_28, %c0_29] : memref<1x128xf32, #tpu.memory_space<vmem>>, vector<1x128xf32>
    %62 = vector.broadcast %61 : vector<1x128xf32> to vector<8x128xf32>
    %63 = arith.addf %60, %62 : vector<8x128xf32>
    %cst_30 = arith.constant dense<0.000000e+00> : vector<8xf32>
    %64 = vector.multi_reduction <add>, %63, %cst_30 [1] : vector<8x128xf32> to vector<8xf32>
    %65 = vector.shape_cast %64 : vector<8xf32> to vector<8x1xf32>
    %cst_31 = arith.constant 3.125000e-02 : f32
    %66 = vector.broadcast %cst_31 : f32 to vector<8x1xf32>
    %67 = arith.mulf %65, %66 : vector<8x1xf32>
    %68 = arith.mulf %63, %63 : vector<8x128xf32>
    %cst_32 = arith.constant dense<0.000000e+00> : vector<8xf32>
    %69 = vector.multi_reduction <add>, %68, %cst_32 [1] : vector<8x128xf32> to vector<8xf32>
    %70 = vector.shape_cast %69 : vector<8xf32> to vector<8x1xf32>
    %cst_33 = arith.constant 3.125000e-02 : f32
    %71 = vector.broadcast %cst_33 : f32 to vector<8x1xf32>
    %72 = arith.mulf %70, %71 : vector<8x1xf32>
    %73 = arith.mulf %67, %67 : vector<8x1xf32>
    %74 = arith.subf %72, %73 : vector<8x1xf32>
    %cst_34 = arith.constant 0.000000e+00 : f32
    %75 = vector.broadcast %cst_34 : f32 to vector<8x1xf32>
    %76 = arith.maximumf %74, %75 : vector<8x1xf32>
    %77 = vector.broadcast %67 : vector<8x1xf32> to vector<8x128xf32>
    %78 = arith.subf %63, %77 : vector<8x128xf32>
    %cst_35 = arith.constant 9.99999974E-6 : f32
    %79 = vector.broadcast %cst_35 : f32 to vector<8x1xf32>
    %80 = arith.addf %76, %79 : vector<8x1xf32>
    %81 = math.rsqrt %80 : vector<8x1xf32>
    %82 = vector.broadcast %81 : vector<8x1xf32> to vector<8x128xf32>
    %83 = arith.mulf %78, %82 : vector<8x128xf32>
    %c0_36 = arith.constant 0 : index
    %c0_37 = arith.constant 0 : index
    %84 = vector.load %arg6[%c0_36, %c0_37] : memref<1x128xf32, #tpu.memory_space<vmem>>, vector<1x128xf32>
    %85 = vector.broadcast %84 : vector<1x128xf32> to vector<8x128xf32>
    %86 = arith.mulf %83, %85 : vector<8x128xf32>
    %c0_38 = arith.constant 0 : index
    %c0_39 = arith.constant 0 : index
    %87 = vector.load %arg7[%c0_38, %c0_39] : memref<1x128xf32, #tpu.memory_space<vmem>>, vector<1x128xf32>
    %88 = vector.broadcast %87 : vector<1x128xf32> to vector<8x128xf32>
    %89 = arith.addf %86, %88 : vector<8x128xf32>
    %cst_40 = arith.constant 0.707106769 : f32
    %90 = vector.broadcast %cst_40 : f32 to vector<8x128xf32>
    %91 = arith.mulf %89, %90 : vector<8x128xf32>
    %92 = math.erf %91 : vector<8x128xf32>
    %93 = arith.truncf %92 : vector<8x128xf32> to vector<8x128xbf16>
    %c0_41 = arith.constant 0 : index
    %c0_42 = arith.constant 0 : index
    %c0_43 = arith.constant 0 : index
    %94 = vector.load %arg8[%c0_41, %c0_42, %c0_43] : memref<3x128x128xbf16, #tpu.memory_space<vmem>>, vector<1x128x128xbf16>
    %95 = vector.shape_cast %94 : vector<1x128x128xbf16> to vector<128x128xbf16>
    %cst_44 = arith.constant dense<0.000000e+00> : vector<8x128xf32>
    %96 = tpu.matmul %93, %95, %cst_44 {dimension_numbers = #tpu.dot_dimension_numbers<[1], [0], [0], [1], [0, 0, 1, 1], [], []>} : vector<8x128xbf16>, vector<128x128xbf16>, vector<8x128xf32> -> vector<8x128xf32>
    %cst_45 = arith.constant 1.000000e+00 : f32
    %97 = vector.broadcast %cst_45 : f32 to vector<8x128xf32>
    %cst_46 = arith.constant 3.000000e+00 : f32
    %98 = vector.broadcast %cst_46 : f32 to vector<8x128xf32>
    %99 = arith.mulf %98, %92 : vector<8x128xf32>
    %100 = arith.mulf %99, %92 : vector<8x128xf32>
    %cst_47 = arith.constant 1.000000e+00 : f32
    %101 = vector.broadcast %cst_47 : f32 to vector<8x128xf32>
    %102 = arith.mulf %101, %97 : vector<8x128xf32>
    %103 = arith.subf %100, %102 : vector<8x128xf32>
    %cst_48 = arith.constant 5.000000e-01 : f32
    %104 = vector.broadcast %cst_48 : f32 to vector<8x128xf32>
    %105 = arith.mulf %103, %104 : vector<8x128xf32>
    %106 = arith.truncf %105 : vector<8x128xf32> to vector<8x128xbf16>
    %c1_49 = arith.constant 1 : index
    %c0_50 = arith.constant 0 : index
    %c0_51 = arith.constant 0 : index
    %107 = vector.load %arg8[%c1_49, %c0_50, %c0_51] : memref<3x128x128xbf16, #tpu.memory_space<vmem>>, vector<1x128x128xbf16>
    %108 = vector.shape_cast %107 : vector<1x128x128xbf16> to vector<128x128xbf16>
    %cst_52 = arith.constant dense<0.000000e+00> : vector<8x128xf32>
    %109 = tpu.matmul %106, %108, %cst_52 {dimension_numbers = #tpu.dot_dimension_numbers<[1], [0], [0], [1], [0, 0, 1, 1], [], []>} : vector<8x128xbf16>, vector<128x128xbf16>, vector<8x128xf32> -> vector<8x128xf32>
    %110 = arith.addf %96, %109 : vector<8x128xf32>
    %cst_53 = arith.constant 5.000000e+00 : f32
    %111 = vector.broadcast %cst_53 : f32 to vector<8x128xf32>
    %112 = arith.mulf %111, %92 : vector<8x128xf32>
    %113 = arith.mulf %112, %105 : vector<8x128xf32>
    %cst_54 = arith.constant 2.000000e+00 : f32
    %114 = vector.broadcast %cst_54 : f32 to vector<8x128xf32>
    %115 = arith.mulf %114, %92 : vector<8x128xf32>
    %116 = arith.subf %113, %115 : vector<8x128xf32>
    %cst_55 = arith.constant 0.333333343 : f32
    %117 = vector.broadcast %cst_55 : f32 to vector<8x128xf32>
    %118 = arith.mulf %116, %117 : vector<8x128xf32>
    %119 = arith.truncf %118 : vector<8x128xf32> to vector<8x128xbf16>
    %c2_56 = arith.constant 2 : index
    %c0_57 = arith.constant 0 : index
    %c0_58 = arith.constant 0 : index
    %120 = vector.load %arg8[%c2_56, %c0_57, %c0_58] : memref<3x128x128xbf16, #tpu.memory_space<vmem>>, vector<1x128x128xbf16>
    %121 = vector.shape_cast %120 : vector<1x128x128xbf16> to vector<128x128xbf16>
    %cst_59 = arith.constant dense<0.000000e+00> : vector<8x128xf32>
    %122 = tpu.matmul %119, %121, %cst_59 {dimension_numbers = #tpu.dot_dimension_numbers<[1], [0], [0], [1], [0, 0, 1, 1], [], []>} : vector<8x128xbf16>, vector<128x128xbf16>, vector<8x128xf32> -> vector<8x128xf32>
    %123 = arith.addf %110, %122 : vector<8x128xf32>
    %c0_60 = arith.constant 0 : index
    %c0_61 = arith.constant 0 : index
    %124 = vector.load %arg9[%c0_60, %c0_61] : memref<1x128xf32, #tpu.memory_space<vmem>>, vector<1x128xf32>
    %125 = vector.broadcast %124 : vector<1x128xf32> to vector<8x128xf32>
    %126 = arith.addf %123, %125 : vector<8x128xf32>
    %cst_62 = arith.constant dense<0.000000e+00> : vector<8xf32>
    %127 = vector.multi_reduction <add>, %126, %cst_62 [1] : vector<8x128xf32> to vector<8xf32>
    %128 = vector.shape_cast %127 : vector<8xf32> to vector<8x1xf32>
    %cst_63 = arith.constant 3.125000e-02 : f32
    %129 = vector.broadcast %cst_63 : f32 to vector<8x1xf32>
    %130 = arith.mulf %128, %129 : vector<8x1xf32>
    %131 = arith.mulf %126, %126 : vector<8x128xf32>
    %cst_64 = arith.constant dense<0.000000e+00> : vector<8xf32>
    %132 = vector.multi_reduction <add>, %131, %cst_64 [1] : vector<8x128xf32> to vector<8xf32>
    %133 = vector.shape_cast %132 : vector<8xf32> to vector<8x1xf32>
    %cst_65 = arith.constant 3.125000e-02 : f32
    %134 = vector.broadcast %cst_65 : f32 to vector<8x1xf32>
    %135 = arith.mulf %133, %134 : vector<8x1xf32>
    %136 = arith.mulf %130, %130 : vector<8x1xf32>
    %137 = arith.subf %135, %136 : vector<8x1xf32>
    %cst_66 = arith.constant 0.000000e+00 : f32
    %138 = vector.broadcast %cst_66 : f32 to vector<8x1xf32>
    %139 = arith.maximumf %137, %138 : vector<8x1xf32>
    %140 = vector.broadcast %130 : vector<8x1xf32> to vector<8x128xf32>
    %141 = arith.subf %126, %140 : vector<8x128xf32>
    %cst_67 = arith.constant 9.99999974E-6 : f32
    %142 = vector.broadcast %cst_67 : f32 to vector<8x1xf32>
    %143 = arith.addf %139, %142 : vector<8x1xf32>
    %144 = math.rsqrt %143 : vector<8x1xf32>
    %145 = vector.broadcast %144 : vector<8x1xf32> to vector<8x128xf32>
    %146 = arith.mulf %141, %145 : vector<8x128xf32>
    %c0_68 = arith.constant 0 : index
    %c0_69 = arith.constant 0 : index
    %147 = vector.load %arg10[%c0_68, %c0_69] : memref<1x128xf32, #tpu.memory_space<vmem>>, vector<1x128xf32>
    %148 = vector.broadcast %147 : vector<1x128xf32> to vector<8x128xf32>
    %149 = arith.mulf %146, %148 : vector<8x128xf32>
    %c0_70 = arith.constant 0 : index
    %c0_71 = arith.constant 0 : index
    %150 = vector.load %arg11[%c0_70, %c0_71] : memref<1x128xf32, #tpu.memory_space<vmem>>, vector<1x128xf32>
    %151 = vector.broadcast %150 : vector<1x128xf32> to vector<8x128xf32>
    %152 = arith.addf %149, %151 : vector<8x128xf32>
    %cst_72 = arith.constant 0.707106769 : f32
    %153 = vector.broadcast %cst_72 : f32 to vector<8x128xf32>
    %154 = arith.mulf %152, %153 : vector<8x128xf32>
    %155 = math.erf %154 : vector<8x128xf32>
    %156 = arith.truncf %155 : vector<8x128xf32> to vector<8x128xbf16>
    %c0_73 = arith.constant 0 : index
    %c0_74 = arith.constant 0 : index
    %c0_75 = arith.constant 0 : index
    %157 = vector.load %arg12[%c0_73, %c0_74, %c0_75] : memref<3x128x128xbf16, #tpu.memory_space<vmem>>, vector<1x128x128xbf16>
    %158 = vector.shape_cast %157 : vector<1x128x128xbf16> to vector<128x128xbf16>
    %cst_76 = arith.constant dense<0.000000e+00> : vector<8x128xf32>
    %159 = tpu.matmul %156, %158, %cst_76 {dimension_numbers = #tpu.dot_dimension_numbers<[1], [0], [0], [1], [0, 0, 1, 1], [], []>} : vector<8x128xbf16>, vector<128x128xbf16>, vector<8x128xf32> -> vector<8x128xf32>
    %cst_77 = arith.constant 1.000000e+00 : f32
    %160 = vector.broadcast %cst_77 : f32 to vector<8x128xf32>
    %cst_78 = arith.constant 3.000000e+00 : f32
    %161 = vector.broadcast %cst_78 : f32 to vector<8x128xf32>
    %162 = arith.mulf %161, %155 : vector<8x128xf32>
    %163 = arith.mulf %162, %155 : vector<8x128xf32>
    %cst_79 = arith.constant 1.000000e+00 : f32
    %164 = vector.broadcast %cst_79 : f32 to vector<8x128xf32>
    %165 = arith.mulf %164, %160 : vector<8x128xf32>
    %166 = arith.subf %163, %165 : vector<8x128xf32>
    %cst_80 = arith.constant 5.000000e-01 : f32
    %167 = vector.broadcast %cst_80 : f32 to vector<8x128xf32>
    %168 = arith.mulf %166, %167 : vector<8x128xf32>
    %169 = arith.truncf %168 : vector<8x128xf32> to vector<8x128xbf16>
    %c1_81 = arith.constant 1 : index
    %c0_82 = arith.constant 0 : index
    %c0_83 = arith.constant 0 : index
    %170 = vector.load %arg12[%c1_81, %c0_82, %c0_83] : memref<3x128x128xbf16, #tpu.memory_space<vmem>>, vector<1x128x128xbf16>
    %171 = vector.shape_cast %170 : vector<1x128x128xbf16> to vector<128x128xbf16>
    %cst_84 = arith.constant dense<0.000000e+00> : vector<8x128xf32>
    %172 = tpu.matmul %169, %171, %cst_84 {dimension_numbers = #tpu.dot_dimension_numbers<[1], [0], [0], [1], [0, 0, 1, 1], [], []>} : vector<8x128xbf16>, vector<128x128xbf16>, vector<8x128xf32> -> vector<8x128xf32>
    %173 = arith.addf %159, %172 : vector<8x128xf32>
    %cst_85 = arith.constant 5.000000e+00 : f32
    %174 = vector.broadcast %cst_85 : f32 to vector<8x128xf32>
    %175 = arith.mulf %174, %155 : vector<8x128xf32>
    %176 = arith.mulf %175, %168 : vector<8x128xf32>
    %cst_86 = arith.constant 2.000000e+00 : f32
    %177 = vector.broadcast %cst_86 : f32 to vector<8x128xf32>
    %178 = arith.mulf %177, %155 : vector<8x128xf32>
    %179 = arith.subf %176, %178 : vector<8x128xf32>
    %cst_87 = arith.constant 0.333333343 : f32
    %180 = vector.broadcast %cst_87 : f32 to vector<8x128xf32>
    %181 = arith.mulf %179, %180 : vector<8x128xf32>
    %182 = arith.truncf %181 : vector<8x128xf32> to vector<8x128xbf16>
    %c2_88 = arith.constant 2 : index
    %c0_89 = arith.constant 0 : index
    %c0_90 = arith.constant 0 : index
    %183 = vector.load %arg12[%c2_88, %c0_89, %c0_90] : memref<3x128x128xbf16, #tpu.memory_space<vmem>>, vector<1x128x128xbf16>
    %184 = vector.shape_cast %183 : vector<1x128x128xbf16> to vector<128x128xbf16>
    %cst_91 = arith.constant dense<0.000000e+00> : vector<8x128xf32>
    %185 = tpu.matmul %182, %184, %cst_91 {dimension_numbers = #tpu.dot_dimension_numbers<[1], [0], [0], [1], [0, 0, 1, 1], [], []>} : vector<8x128xbf16>, vector<128x128xbf16>, vector<8x128xf32> -> vector<8x128xf32>
    %186 = arith.addf %173, %185 : vector<8x128xf32>
    %c0_92 = arith.constant 0 : index
    %c0_93 = arith.constant 0 : index
    %187 = vector.load %arg13[%c0_92, %c0_93] : memref<1x128xf32, #tpu.memory_space<vmem>>, vector<1x128xf32>
    %188 = vector.broadcast %187 : vector<1x128xf32> to vector<8x128xf32>
    %189 = arith.addf %186, %188 : vector<8x128xf32>
    %c0_94 = arith.constant 0 : index
    %c0_95 = arith.constant 0 : index
    %190 = vector.load %arg14[%c0_94, %c0_95] : memref<8x128xf32, #tpu.memory_space<vmem>>, vector<8x128xf32>
    tpu.vector_store %arg14[%c0_94, %c0_95], %189 {strides = array<i32>} : memref<8x128xf32, #tpu.memory_space<vmem>>, vector<8x128xf32>,
    return
  }
  func.func @transform_0(%arg0: i32) -> (i32, i32) {
    %c0_i32 = arith.constant 0 : i32
    %c0_i32_0 = arith.constant 0 : i32
    return %arg0, %c0_i32 : i32, i32
  }
  func.func @transform_1(%arg0: i32) -> (i32, i32) {
    %c0_i32 = arith.constant 0 : i32
    %c0_i32_0 = arith.constant 0 : i32
    %c0_i32_1 = arith.constant 0 : i32
    return %c0_i32, %c0_i32_0 : i32, i32
  }
  func.func @transform_2(%arg0: i32) -> (i32, i32) {
    %c0_i32 = arith.constant 0 : i32
    %c0_i32_0 = arith.constant 0 : i32
    %c0_i32_1 = arith.constant 0 : i32
    return %c0_i32, %c0_i32_0 : i32, i32
  }
  func.func @transform_3(%arg0: i32) -> (i32, i32, i32) {
    %c0_i32 = arith.constant 0 : i32
    %c0_i32_0 = arith.constant 0 : i32
    %c0_i32_1 = arith.constant 0 : i32
    %c0_i32_2 = arith.constant 0 : i32
    return %c0_i32, %c0_i32_0, %c0_i32_1 : i32, i32, i32
  }
  func.func @transform_4(%arg0: i32) -> (i32, i32) {
    %c0_i32 = arith.constant 0 : i32
    %c0_i32_0 = arith.constant 0 : i32
    %c0_i32_1 = arith.constant 0 : i32
    return %c0_i32, %c0_i32_0 : i32, i32
  }
  func.func @transform_5(%arg0: i32) -> (i32, i32) {
    %c0_i32 = arith.constant 0 : i32
    %c0_i32_0 = arith.constant 0 : i32
    %c0_i32_1 = arith.constant 0 : i32
    return %c0_i32, %c0_i32_0 : i32, i32
  }
  func.func @transform_6(%arg0: i32) -> (i32, i32) {
    %c0_i32 = arith.constant 0 : i32
    %c0_i32_0 = arith.constant 0 : i32
    %c0_i32_1 = arith.constant 0 : i32
    return %c0_i32, %c0_i32_0 : i32, i32
  }
  func.func @transform_7(%arg0: i32) -> (i32, i32, i32) {
    %c0_i32 = arith.constant 0 : i32
    %c0_i32_0 = arith.constant 0 : i32
    %c0_i32_1 = arith.constant 0 : i32
    %c0_i32_2 = arith.constant 0 : i32
    return %c0_i32, %c0_i32_0, %c0_i32_1 : i32, i32, i32
  }
  func.func @transform_8(%arg0: i32) -> (i32, i32) {
    %c0_i32 = arith.constant 0 : i32
    %c0_i32_0 = arith.constant 0 : i32
    %c0_i32_1 = arith.constant 0 : i32
    return %c0_i32, %c0_i32_0 : i32, i32
  }
  func.func @transform_9(%arg0: i32) -> (i32, i32) {
    %c0_i32 = arith.constant 0 : i32
    %c0_i32_0 = arith.constant 0 : i32
    %c0_i32_1 = arith.constant 0 : i32
    return %c0_i32, %c0_i32_0 : i32, i32
  }
  func.func @transform_10(%arg0: i32) -> (i32, i32) {
    %c0_i32 = arith.constant 0 : i32
    %c0_i32_0 = arith.constant 0 : i32
    %c0_i32_1 = arith.constant 0 : i32
    return %c0_i32, %c0_i32_0 : i32, i32
  }
  func.func @transform_11(%arg0: i32) -> (i32, i32, i32) {
    %c0_i32 = arith.constant 0 : i32
    %c0_i32_0 = arith.constant 0 : i32
    %c0_i32_1 = arith.constant 0 : i32
    %c0_i32_2 = arith.constant 0 : i32
    return %c0_i32, %c0_i32_0, %c0_i32_1 : i32, i32, i32
  }
  func.func @transform_12(%arg0: i32) -> (i32, i32) {
    %c0_i32 = arith.constant 0 : i32
    %c0_i32_0 = arith.constant 0 : i32
    %c0_i32_1 = arith.constant 0 : i32
    return %c0_i32, %c0_i32_0 : i32, i32
  }
  func.func @transform_13(%arg0: i32) -> (i32, i32) {
    %c0_i32 = arith.constant 0 : i32
    %c0_i32_0 = arith.constant 0 : i32
    return %arg0, %c0_i32 : i32, i32
  }
}

</mosaic_0001>

<llo_original>
// kernel: qkal_forward.1
$region0: #{qkal_forward.1}
  #allocation0 [shape = 'u32[]', space=smem, size = 0x4, offset = 0x4, fixed_abs, tag = 'smem constant byte address 0x4 - core index']
  #allocation1 [shape = 'u32[144,128]{1,0:T(1,128)}', space=vmem, size = 0x12000, scoped, tag = 'internal scratch']
  %s0 = inlined_call_operand.vmem [shape: f32[8,64], index: 0, kind: input, shape index: {}]
  %s1 = inlined_call_operand.vmem [shape: f32[1,64], index: 1, kind: input, shape index: {}]
  %s2 = inlined_call_operand.vmem [shape: f32[1,64], index: 2, kind: input, shape index: {}]
  %s3 = inlined_call_operand.vmem [shape: bf16[3,64,128], index: 3, kind: input, shape index: {}]
  %s4 = inlined_call_operand.vmem [shape: f32[1,128], index: 4, kind: input, shape index: {}]
  %s5 = inlined_call_operand.vmem [shape: f32[1,128], index: 5, kind: input, shape index: {}]
  %s6 = inlined_call_operand.vmem [shape: f32[1,128], index: 6, kind: input, shape index: {}]
  %s7 = inlined_call_operand.vmem [shape: bf16[3,128,128], index: 7, kind: input, shape index: {}]
  %s8 = inlined_call_operand.vmem [shape: f32[1,128], index: 8, kind: input, shape index: {}]
  %s9 = inlined_call_operand.vmem [shape: f32[1,128], index: 9, kind: input, shape index: {}]
  %s10 = inlined_call_operand.vmem [shape: f32[1,128], index: 10, kind: input, shape index: {}]
  %s11 = inlined_call_operand.vmem [shape: bf16[3,128,128], index: 11, kind: input, shape index: {}]
  %s12 = inlined_call_operand.vmem [shape: f32[1,128], index: 12, kind: input, shape index: {}]
  %s13 = inlined_call_operand.hbm [shape: f32[8,128], index: 13, kind: output, shape index: {}]
  %s14 = sld [smem:[#allocation0]]
  $region62: #{qkal_forward.1} parent=0
    _
  %s16 = ssub.s32 1, %s14
  %s17 = scalar_select 0, %s16, %s14
  $region1: #{qkal_forward.1} parent=0
    #allocation2 [shape = 'u8[4096]{0}', space=vmem, size = 0x1000, scoped, tag = 'output window, operand 0, single buffered']
    #allocation3 [shape = 's32[1]{0}', space=sflag, size = 0x4, scoped, tag = 'scoped memory for qkal_forward.1']
    %18 = vsyncpa [#allocation3], 0
    // Predicated region
    $region2: #{qkal_forward.1} parent=1 // pred_check
      _
    $region3: #{qkal_forward.1} parent=1 // pred_check_branch
      %20 = sbr.rel (0) target = $region5
    $region4: #{qkal_forward.1} parent=1 // pred_region
      _
    $region5: #{qkal_forward.1} parent=1 // pred_fallthru
      _
    // Predicated region
    $region6: #{qkal_forward.1} parent=1 // pred_check
      _
    $region7: #{qkal_forward.1} parent=1 // pred_check_branch
      %22 = sbr.rel (0) target = $region9
    $region8: #{qkal_forward.1} parent=1 // pred_region
      _
    $region9: #{qkal_forward.1} parent=1 // pred_fallthru
      _
    // Predicated region
    $region10: #{qkal_forward.1} parent=1 // pred_check
      _
    $region11: #{qkal_forward.1} parent=1 // pred_check_branch
      %24 = sbr.rel (0) target = $region13
    $region12: #{qkal_forward.1} parent=1 // pred_region
      _
    $region13: #{qkal_forward.1} parent=1 // pred_fallthru
      _
    // Predicated region
    $region14: #{qkal_forward.1} parent=1 // pred_check
      _
    $region15: #{qkal_forward.1} parent=1 // pred_check_branch
      %26 = sbr.rel (0) target = $region17
    $region16: #{qkal_forward.1} parent=1 // pred_region
      _
    $region17: #{qkal_forward.1} parent=1 // pred_fallthru
      _
    // Predicated region
    $region18: #{qkal_forward.1} parent=1 // pred_check
      _
    $region19: #{qkal_forward.1} parent=1 // pred_check_branch
      %28 = sbr.rel (0) target = $region21
    $region20: #{qkal_forward.1} parent=1 // pred_region
      _
    $region21: #{qkal_forward.1} parent=1 // pred_fallthru
      _
    // Predicated region
    $region22: #{qkal_forward.1} parent=1 // pred_check
      _
    $region23: #{qkal_forward.1} parent=1 // pred_check_branch
      %30 = sbr.rel (0) target = $region25
    $region24: #{qkal_forward.1} parent=1 // pred_region
      _
    $region25: #{qkal_forward.1} parent=1 // pred_fallthru
      _
    // Predicated region
    $region26: #{qkal_forward.1} parent=1 // pred_check
      _
    $region27: #{qkal_forward.1} parent=1 // pred_check_branch
      %32 = sbr.rel (0) target = $region29
    $region28: #{qkal_forward.1} parent=1 // pred_region
      _
    $region29: #{qkal_forward.1} parent=1 // pred_fallthru
      _
    // Predicated region
    $region30: #{qkal_forward.1} parent=1 // pred_check
      _
    $region31: #{qkal_forward.1} parent=1 // pred_check_branch
      %34 = sbr.rel (0) target = $region33
    $region32: #{qkal_forward.1} parent=1 // pred_region
      _
    $region33: #{qkal_forward.1} parent=1 // pred_fallthru
      _
    // Predicated region
    $region34: #{qkal_forward.1} parent=1 // pred_check
      _
    $region35: #{qkal_forward.1} parent=1 // pred_check_branch
      %36 = sbr.rel (0) target = $region37
    $region36: #{qkal_forward.1} parent=1 // pred_region
      _
    $region37: #{qkal_forward.1} parent=1 // pred_fallthru
      _
    // Predicated region
    $region38: #{qkal_forward.1} parent=1 // pred_check
      _
    $region39: #{qkal_forward.1} parent=1 // pred_check_branch
      %38 = sbr.rel (0) target = $region41
    $region40: #{qkal_forward.1} parent=1 // pred_region
      _
    $region41: #{qkal_forward.1} parent=1 // pred_fallthru
      _
    // Predicated region
    $region42: #{qkal_forward.1} parent=1 // pred_check
      _
    $region43: #{qkal_forward.1} parent=1 // pred_check_branch
      %40 = sbr.rel (0) target = $region45
    $region44: #{qkal_forward.1} parent=1 // pred_region
      _
    $region45: #{qkal_forward.1} parent=1 // pred_fallthru
      _
    // Predicated region
    $region46: #{qkal_forward.1} parent=1 // pred_check
      _
    $region47: #{qkal_forward.1} parent=1 // pred_check_branch
      %42 = sbr.rel (0) target = $region49
    $region48: #{qkal_forward.1} parent=1 // pred_region
      _
    $region49: #{qkal_forward.1} parent=1 // pred_fallthru
      _
    // Predicated region
    $region50: #{qkal_forward.1} parent=1 // pred_check
      _
    $region51: #{qkal_forward.1} parent=1 // pred_check_branch
      %44 = sbr.rel (0) target = $region53
    $region52: #{qkal_forward.1} parent=1 // pred_region
      _
    $region53: #{qkal_forward.1} parent=1 // pred_fallthru
      _
    %v46 = vld [vmem:[%s0] sm:$0xff]
    %vm47 = vcmask 523264
    %v48 = vsel %vm47, %v46, 0.0
    %49 = vadd.xlane.f32.xlu0 %v48
    %v50 = vpop.xlane.xlu0 %49
    %v51 = vmul.f32 %v50, 0.015625
    %v52 = vmul.f32 %v46, %v46
    %v53 = vsel %vm47, %v52, 0.0
    %54 = vadd.xlane.f32.xlu0 %v53
    %v55 = vpop.xlane.xlu0 %54
    %v56 = vmul.f32 %v55, 0.015625
    %v57 = vmul.f32 %v51, %v51
    %v58 = vsub.f32 %v56, %v57
    %v59 = vmax.f32 %v58, 0.0
    %v60 = vsub.f32 %v46, %v51
    %v61 = vadd.f32 %v59, 1e-05
    %v62 = vrsqrt.pop %v61
    %v63 = vmul.f32 %v60, %v62
    %v64 = vld [vmem:[%s1] sm:$0x1]
    %v66 = vlaneseq
    %v67 = vshrl.u32 %v66, 7
    %v68 = vsub.s32 0, %v67
    %v69 = vrot.slane %v64, %v68
    %v71 = vmul.f32 %v63, %v69
    %v72 = vld [vmem:[%s2] sm:$0x1]
    %v74 = vlaneseq
    %v75 = vshrl.u32 %v74, 7
    %v76 = vsub.s32 0, %v75
    %v77 = vrot.slane %v72, %v76
    %v79 = vadd.f32 %v71, %v77
    %v80 = vmul.f32 %v79, 0.70710677
    %v81 = verf.f32.pop %v80
    %v82 = vpack.c.bf16 %v81, %v81
    %v83 = vld [vmem:[%s3] sm:$0xf]
    %v84 = vld [vmem:[%s3 + $0x4] sm:$0xf]
    %v85 = vld [vmem:[%s3 + $0x8] sm:$0xf]
    %v86 = vld [vmem:[%s3 + $0xc] sm:$0xf]
    %v87 = vld [vmem:[%s3 + $0x10] sm:$0xf]
    %v88 = vld [vmem:[%s3 + $0x14] sm:$0xf]
    %v89 = vld [vmem:[%s3 + $0x18] sm:$0xf]
    %v90 = vld [vmem:[%s3 + $0x1c] sm:$0xf]
    %v91 = vmul.f32 %v81, 3.0
    %v92 = vmul.f32 %v91, %v81
    %v93 = vsub.f32 %v92, 1.0
    %v94 = vmul.f32 %v93, 0.5
    %v95 = vpack.c.bf16 %v94, %v94
    %s96 = scalar_lea.vmem %s3, 32
    %v97 = vld [vmem:[%s96] sm:$0xf]
    %v98 = vld [vmem:[%s96 + $0x4] sm:$0xf]
    %v99 = vld [vmem:[%s96 + $0x8] sm:$0xf]
    %v100 = vld [vmem:[%s96 + $0xc] sm:$0xf]
    %v101 = vld [vmem:[%s96 + $0x10] sm:$0xf]
    %v102 = vld [vmem:[%s96 + $0x14] sm:$0xf]
    %v103 = vld [vmem:[%s96 + $0x18] sm:$0xf]
    %v104 = vld [vmem:[%s96 + $0x1c] sm:$0xf]
    %v113 = vunpack.c.l.b16 %v97
    %v114 = vunpack.c.l.b16 %v98
    %v115 = vunpack.c.l.b16 %v99
    %v116 = vunpack.c.l.b16 %v100
    %v117 = vunpack.c.l.b16 %v101
    %v118 = vunpack.c.l.b16 %v102
    %v119 = vunpack.c.l.b16 %v103
    %v120 = vunpack.c.l.b16 %v104
    %v121 = vpack.c.b16 %v114, %v113
    %v122 = vpack.c.b16 %v116, %v115
    %v123 = vpack.c.b16 %v118, %v117
    %v124 = vpack.c.b16 %v120, %v119
    %v130 = vsel %vm47, %v95, 0
    %132 = vmatprep.subr.bf16.mxu0 0
    %133 = vmatpush1.bf16.msra.mxu0 %v121
    %134 = vmatprep.subr.bf16.mxu0 0
    %135 = vmatpush1.bf16.msra.mxu0 %v122
    %136 = vmatprep.subr.bf16.mxu0 0
    %137 = vmatpush1.bf16.msra.mxu0 %v123
    %138 = vmatprep.subr.bf16.mxu0 0
    %139 = vmatpush1.bf16.msra.mxu0 %v124
    %140 = vmatprep.subr.bf16.mxu0 0
    %141 = vmatpush1.bf16.msra.mxu0 0
    %142 = vmatprep.subr.bf16.mxu0 0
    %143 = vmatpush1.bf16.msra.mxu0 0
    %144 = vmatprep.subr.bf16.mxu0 0
    %145 = vmatpush1.bf16.msra.mxu0 0
    %146 = vmatprep.subr.bf16.mxu0 0
    %147 = vmatpush1.bf16.msra.mxu0 0
    %148 = vmatprep.subr.bf16.mxu0 0
    %149 = vmatpush1.bf16.msra.mxu0 0
    %150 = vmatprep.subr.bf16.mxu0 0
    %151 = vmatpush1.bf16.msra.mxu0 0
    %152 = vmatprep.subr.bf16.mxu0 0
    %153 = vmatpush1.bf16.msra.mxu0 0
    %154 = vmatprep.subr.bf16.mxu0 0
    %155 = vmatpush1.bf16.msra.mxu0 0
    %156 = vmatprep.subr.bf16.mxu0 0
    %157 = vmatpush1.bf16.msra.mxu0 0
    %158 = vmatprep.subr.bf16.mxu0 0
    %159 = vmatpush1.bf16.msra.mxu0 0
    %160 = vmatprep.subr.bf16.mxu0 0
    %161 = vmatpush1.bf16.msra.mxu0 0
    %162 = vmatprep.subr.bf16.mxu0 0
    %163 = vmatpush1.bf16.msra.mxu0 0
    %164 = vmatprep.mubr.bf16.mxu0 0
    %165 = vmatmul.mubr.bf16.gmra.mrb[0].mxu0 %v130
    %v166 = vpop.f32.mrb[0].mxu0
    %v167 = vadd.f32 0.0, %v166
    %v168 = vpop.f32.mrb[0].mxu0
    %v169 = vpop.f32.mrb[0].mxu0
    %v170 = vpop.f32.mrb[0].mxu0
    %171 = vdwg.mxu0
    %v180 = vunpack.c.l.b16 %v83
    %v181 = vunpack.c.l.b16 %v84
    %v182 = vunpack.c.l.b16 %v85
    %v183 = vunpack.c.l.b16 %v86
    %v184 = vunpack.c.l.b16 %v87
    %v185 = vunpack.c.l.b16 %v88
    %v186 = vunpack.c.l.b16 %v89
    %v187 = vunpack.c.l.b16 %v90
    %v188 = vpack.c.b16 %v181, %v180
    %v189 = vpack.c.b16 %v183, %v182
    %v190 = vpack.c.b16 %v185, %v184
    %v191 = vpack.c.b16 %v187, %v186
    %v197 = vsel %vm47, %v82, 0
    %199 = vmatprep.subr.bf16.mxu0 0
    %200 = vmatpush1.bf16.msra.mxu0 %v188
    %201 = vmatprep.subr.bf16.mxu0 0
    %202 = vmatpush1.bf16.msra.mxu0 %v189
    %203 = vmatprep.subr.bf16.mxu0 0
    %204 = vmatpush1.bf16.msra.mxu0 %v190
    %205 = vmatprep.subr.bf16.mxu0 0
    %206 = vmatpush1.bf16.msra.mxu0 %v191
    %207 = vmatprep.subr.bf16.mxu0 0
    %208 = vmatpush1.bf16.msra.mxu0 0
    %209 = vmatprep.subr.bf16.mxu0 0
    %210 = vmatpush1.bf16.msra.mxu0 0
    %211 = vmatprep.subr.bf16.mxu0 0
    %212 = vmatpush1.bf16.msra.mxu0 0
    %213 = vmatprep.subr.bf16.mxu0 0
    %214 = vmatpush1.bf16.msra.mxu0 0
    %215 = vmatprep.subr.bf16.mxu0 0
    %216 = vmatpush1.bf16.msra.mxu0 0
    %217 = vmatprep.subr.bf16.mxu0 0
    %218 = vmatpush1.bf16.msra.mxu0 0
    %219 = vmatprep.subr.bf16.mxu0 0
    %220 = vmatpush1.bf16.msra.mxu0 0
    %221 = vmatprep.subr.bf16.mxu0 0
    %222 = vmatpush1.bf16.msra.mxu0 0
    %223 = vmatprep.subr.bf16.mxu0 0
    %224 = vmatpush1.bf16.msra.mxu0 0
    %225 = vmatprep.subr.bf16.mxu0 0
    %226 = vmatpush1.bf16.msra.mxu0 0
    %227 = vmatprep.subr.bf16.mxu0 0
    %228 = vmatpush1.bf16.msra.mxu0 0
    %229 = vmatprep.subr.bf16.mxu0 0
    %230 = vmatpush1.bf16.msra.mxu0 0
    %231 = vmatprep.mubr.bf16.mxu0 0
    %232 = vmatmul.mubr.bf16.gmra.mrb[0].mxu0 %v197
    %v233 = vpop.f32.mrb[0].mxu0
    %v234 = vadd.f32 %v167, %v233
    %v235 = vpop.f32.mrb[0].mxu0
    %v236 = vpop.f32.mrb[0].mxu0
    %v237 = vpop.f32.mrb[0].mxu0
    %238 = vdwg.mxu0
    %v239 = vmul.f32 %v81, 5.0
    %v240 = vmul.f32 %v239, %v94
    %v241 = vmul.f32 %v81, 2.0
    %v242 = vsub.f32 %v240, %v241
    %v243 = vmul.f32 %v242, 0.33333334
    %v244 = vpack.c.bf16 %v243, %v243
    %s245 = scalar_lea.vmem %s3, 64
    %v246 = vld [vmem:[%s245] sm:$0xf]
    %v247 = vld [vmem:[%s245 + $0x4] sm:$0xf]
    %v248 = vld [vmem:[%s245 + $0x8] sm:$0xf]
    %v249 = vld [vmem:[%s245 + $0xc] sm:$0xf]
    %v250 = vld [vmem:[%s245 + $0x10] sm:$0xf]
    %v251 = vld [vmem:[%s245 + $0x14] sm:$0xf]
    %v252 = vld [vmem:[%s245 + $0x18] sm:$0xf]
    %v253 = vld [vmem:[%s245 + $0x1c] sm:$0xf]
    %v262 = vunpack.c.l.b16 %v246
    %v263 = vunpack.c.l.b16 %v247
    %v264 = vunpack.c.l.b16 %v248
    %v265 = vunpack.c.l.b16 %v249
    %v266 = vunpack.c.l.b16 %v250
    %v267 = vunpack.c.l.b16 %v251
    %v268 = vunpack.c.l.b16 %v252
    %v269 = vunpack.c.l.b16 %v253
    %v270 = vpack.c.b16 %v263, %v262
    %v271 = vpack.c.b16 %v265, %v264
    %v272 = vpack.c.b16 %v267, %v266
    %v273 = vpack.c.b16 %v269, %v268
    %v279 = vsel %vm47, %v244, 0
    %281 = vmatprep.subr.bf16.mxu0 0
    %282 = vmatpush1.bf16.msra.mxu0 %v270
    %283 = vmatprep.subr.bf16.mxu0 0
    %284 = vmatpush1.bf16.msra.mxu0 %v271
    %285 = vmatprep.subr.bf16.mxu0 0
    %286 = vmatpush1.bf16.msra.mxu0 %v272
    %287 = vmatprep.subr.bf16.mxu0 0
    %288 = vmatpush1.bf16.msra.mxu0 %v273
    %289 = vmatprep.subr.bf16.mxu0 0
    %290 = vmatpush1.bf16.msra.mxu0 0
    %291 = vmatprep.subr.bf16.mxu0 0
    %292 = vmatpush1.bf16.msra.mxu0 0
    %293 = vmatprep.subr.bf16.mxu0 0
    %294 = vmatpush1.bf16.msra.mxu0 0
    %295 = vmatprep.subr.bf16.mxu0 0
    %296 = vmatpush1.bf16.msra.mxu0 0
    %297 = vmatprep.subr.bf16.mxu0 0
    %298 = vmatpush1.bf16.msra.mxu0 0
    %299 = vmatprep.subr.bf16.mxu0 0
    %300 = vmatpush1.bf16.msra.mxu0 0
    %301 = vmatprep.subr.bf16.mxu0 0
    %302 = vmatpush1.bf16.msra.mxu0 0
    %303 = vmatprep.subr.bf16.mxu0 0
    %304 = vmatpush1.bf16.msra.mxu0 0
    %305 = vmatprep.subr.bf16.mxu0 0
    %306 = vmatpush1.bf16.msra.mxu0 0
    %307 = vmatprep.subr.bf16.mxu0 0
    %308 = vmatpush1.bf16.msra.mxu0 0
    %309 = vmatprep.subr.bf16.mxu0 0
    %310 = vmatpush1.bf16.msra.mxu0 0
    %311 = vmatprep.subr.bf16.mxu0 0
    %312 = vmatpush1.bf16.msra.mxu0 0
    %313 = vmatprep.mubr.bf16.mxu0 0
    %314 = vmatmul.mubr.bf16.gmra.mrb[0].mxu0 %v279
    %v315 = vpop.f32.mrb[0].mxu0
    %v316 = vadd.f32 0.0, %v315
    %v317 = vpop.f32.mrb[0].mxu0
    %v318 = vpop.f32.mrb[0].mxu0
    %v319 = vpop.f32.mrb[0].mxu0
    %320 = vdwg.mxu0
    %v321 = vadd.f32 %v234, %v316
    %v322 = vld [vmem:[%s4] sm:$0x1]
    %v324 = vlaneseq
    %v325 = vshrl.u32 %v324, 7
    %v326 = vsub.s32 0, %v325
    %v327 = vrot.slane %v322, %v326
    %v329 = vadd.f32 %v321, %v327
    %330 = vadd.xlane.f32.xlu0 %v329
    %v331 = vpop.xlane.xlu0 %330
    %v332 = vmul.f32 %v331, 0.03125
    %v333 = vmul.f32 %v329, %v329
    %334 = vadd.xlane.f32.xlu0 %v333
    %v335 = vpop.xlane.xlu0 %334
    %v336 = vmul.f32 %v335, 0.03125
    %v337 = vmul.f32 %v332, %v332
    %v338 = vsub.f32 %v336, %v337
    %v339 = vmax.f32 %v338, 0.0
    %v340 = vsub.f32 %v329, %v332
    %v341 = vadd.f32 %v339, 1e-05
    %v342 = vrsqrt.pop %v341
    %v343 = vmul.f32 %v340, %v342
    %v344 = vld [vmem:[%s5] sm:$0x1]
    %v346 = vlaneseq
    %v347 = vshrl.u32 %v346, 7
    %v348 = vsub.s32 0, %v347
    %v349 = vrot.slane %v344, %v348
    %v351 = vmul.f32 %v343, %v349
    %v352 = vld [vmem:[%s6] sm:$0x1]
    %v354 = vlaneseq
    %v355 = vshrl.u32 %v354, 7
    %v356 = vsub.s32 0, %v355
    %v357 = vrot.slane %v352, %v356
    %v359 = vadd.f32 %v351, %v357
    %v360 = vmul.f32 %v359, 0.70710677
    %v361 = verf.f32.pop %v360
    %v362 = vpack.c.bf16 %v361, %v361
    %v363 = vld [vmem:[%s7] sm:$0xf]
    %v364 = vld [vmem:[%s7 + $0x4] sm:$0xf]
    %v365 = vld [vmem:[%s7 + $0x8] sm:$0xf]
    %v366 = vld [vmem:[%s7 + $0xc] sm:$0xf]
    %v367 = vld [vmem:[%s7 + $0x10] sm:$0xf]
    %v368 = vld [vmem:[%s7 + $0x14] sm:$0xf]
    %v369 = vld [vmem:[%s7 + $0x18] sm:$0xf]
    %v370 = vld [vmem:[%s7 + $0x1c] sm:$0xf]
    %v371 = vld [vmem:[%s7 + $0x20] sm:$0xf]
    %v372 = vld [vmem:[%s7 + $0x24] sm:$0xf]
    %v373 = vld [vmem:[%s7 + $0x28] sm:$0xf]
    %v374 = vld [vmem:[%s7 + $0x2c] sm:$0xf]
    %v375 = vld [vmem:[%s7 + $0x30] sm:$0xf]
    %v376 = vld [vmem:[%s7 + $0x34] sm:$0xf]
    %v377 = vld [vmem:[%s7 + $0x38] sm:$0xf]
    %v378 = vld [vmem:[%s7 + $0x3c] sm:$0xf]
    %v379 = vmul.f32 %v361, 3.0
    %v380 = vmul.f32 %v379, %v361
    %v381 = vsub.f32 %v380, 1.0
    %v382 = vmul.f32 %v381, 0.5
    %v383 = vpack.c.bf16 %v382, %v382
    %s384 = scalar_lea.vmem %s7, 64
    %v385 = vld [vmem:[%s384] sm:$0xf]
    %v386 = vld [vmem:[%s384 + $0x4] sm:$0xf]
    %v387 = vld [vmem:[%s384 + $0x8] sm:$0xf]
    %v388 = vld [vmem:[%s384 + $0xc] sm:$0xf]
    %v389 = vld [vmem:[%s384 + $0x10] sm:$0xf]
    %v390 = vld [vmem:[%s384 + $0x14] sm:$0xf]
    %v391 = vld [vmem:[%s384 + $0x18] sm:$0xf]
    %v392 = vld [vmem:[%s384 + $0x1c] sm:$0xf]
    %v393 = vld [vmem:[%s384 + $0x20] sm:$0xf]
    %v394 = vld [vmem:[%s384 + $0x24] sm:$0xf]
    %v395 = vld [vmem:[%s384 + $0x28] sm:$0xf]
    %v396 = vld [vmem:[%s384 + $0x2c] sm:$0xf]
    %v397 = vld [vmem:[%s384 + $0x30] sm:$0xf]
    %v398 = vld [vmem:[%s384 + $0x34] sm:$0xf]
    %v399 = vld [vmem:[%s384 + $0x38] sm:$0xf]
    %v400 = vld [vmem:[%s384 + $0x3c] sm:$0xf]
    %v417 = vunpack.c.l.b16 %v385
    %v418 = vunpack.c.l.b16 %v386
    %v419 = vunpack.c.l.b16 %v387
    %v420 = vunpack.c.l.b16 %v388
    %v421 = vunpack.c.l.b16 %v389
    %v422 = vunpack.c.l.b16 %v390
    %v423 = vunpack.c.l.b16 %v391
    %v424 = vunpack.c.l.b16 %v392
    %v425 = vunpack.c.l.b16 %v393
    %v426 = vunpack.c.l.b16 %v394
    %v427 = vunpack.c.l.b16 %v395
    %v428 = vunpack.c.l.b16 %v396
    %v429 = vunpack.c.l.b16 %v397
    %v430 = vunpack.c.l.b16 %v398
    %v431 = vunpack.c.l.b16 %v399
    %v432 = vunpack.c.l.b16 %v400
    %v433 = vpack.c.b16 %v418, %v417
    %v434 = vpack.c.b16 %v420, %v419
    %v435 = vpack.c.b16 %v422, %v421
    %v436 = vpack.c.b16 %v424, %v423
    %v437 = vpack.c.b16 %v426, %v425
    %v438 = vpack.c.b16 %v428, %v427
    %v439 = vpack.c.b16 %v430, %v429
    %v440 = vpack.c.b16 %v432, %v431
    %449 = vmatprep.subr.bf16.mxu0 0
    %450 = vmatpush1.bf16.msra.mxu0 %v433
    %451 = vmatprep.subr.bf16.mxu0 0
    %452 = vmatpush1.bf16.msra.mxu0 %v434
    %453 = vmatprep.subr.bf16.mxu0 0
    %454 = vmatpush1.bf16.msra.mxu0 %v435
    %455 = vmatprep.subr.bf16.mxu0 0
    %456 = vmatpush1.bf16.msra.mxu0 %v436
    %457 = vmatprep.subr.bf16.mxu0 0
    %458 = vmatpush1.bf16.msra.mxu0 %v437
    %459 = vmatprep.subr.bf16.mxu0 0
    %460 = vmatpush1.bf16.msra.mxu0 %v438
    %461 = vmatprep.subr.bf16.mxu0 0
    %462 = vmatpush1.bf16.msra.mxu0 %v439
    %463 = vmatprep.subr.bf16.mxu0 0
    %464 = vmatpush1.bf16.msra.mxu0 %v440
    %465 = vmatprep.subr.bf16.mxu0 0
    %466 = vmatpush1.bf16.msra.mxu0 0
    %467 = vmatprep.subr.bf16.mxu0 0
    %468 = vmatpush1.bf16.msra.mxu0 0
    %469 = vmatprep.subr.bf16.mxu0 0
    %470 = vmatpush1.bf16.msra.mxu0 0
    %471 = vmatprep.subr.bf16.mxu0 0
    %472 = vmatpush1.bf16.msra.mxu0 0
    %473 = vmatprep.subr.bf16.mxu0 0
    %474 = vmatpush1.bf16.msra.mxu0 0
    %475 = vmatprep.subr.bf16.mxu0 0
    %476 = vmatpush1.bf16.msra.mxu0 0
    %477 = vmatprep.subr.bf16.mxu0 0
    %478 = vmatpush1.bf16.msra.mxu0 0
    %479 = vmatprep.subr.bf16.mxu0 0
    %480 = vmatpush1.bf16.msra.mxu0 0
    %481 = vmatprep.mubr.bf16.mxu0 0
    %482 = vmatmul.mubr.bf16.gmra.mrb[0].mxu0 %v383
    %v483 = vpop.f32.mrb[0].mxu0
    %v484 = vadd.f32 0.0, %v483
    %v485 = vpop.f32.mrb[0].mxu0
    %v486 = vpop.f32.mrb[0].mxu0
    %v487 = vpop.f32.mrb[0].mxu0
    %488 = vdwg.mxu0
    %v505 = vunpack.c.l.b16 %v363
    %v506 = vunpack.c.l.b16 %v364
    %v507 = vunpack.c.l.b16 %v365
    %v508 = vunpack.c.l.b16 %v366
    %v509 = vunpack.c.l.b16 %v367
    %v510 = vunpack.c.l.b16 %v368
    %v511 = vunpack.c.l.b16 %v369
    %v512 = vunpack.c.l.b16 %v370
    %v513 = vunpack.c.l.b16 %v371
    %v514 = vunpack.c.l.b16 %v372
    %v515 = vunpack.c.l.b16 %v373
    %v516 = vunpack.c.l.b16 %v374
    %v517 = vunpack.c.l.b16 %v375
    %v518 = vunpack.c.l.b16 %v376
    %v519 = vunpack.c.l.b16 %v377
    %v520 = vunpack.c.l.b16 %v378
    %v521 = vpack.c.b16 %v506, %v505
    %v522 = vpack.c.b16 %v508, %v507
    %v523 = vpack.c.b16 %v510, %v509
    %v524 = vpack.c.b16 %v512, %v511
    %v525 = vpack.c.b16 %v514, %v513
    %v526 = vpack.c.b16 %v516, %v515
    %v527 = vpack.c.b16 %v518, %v517
    %v528 = vpack.c.b16 %v520, %v519
    %537 = vmatprep.subr.bf16.mxu0 0
    %538 = vmatpush1.bf16.msra.mxu0 %v521
    %539 = vmatprep.subr.bf16.mxu0 0
    %540 = vmatpush1.bf16.msra.mxu0 %v522
    %541 = vmatprep.subr.bf16.mxu0 0
    %542 = vmatpush1.bf16.msra.mxu0 %v523
    %543 = vmatprep.subr.bf16.mxu0 0
    %544 = vmatpush1.bf16.msra.mxu0 %v524
    %545 = vmatprep.subr.bf16.mxu0 0
    %546 = vmatpush1.bf16.msra.mxu0 %v525
    %547 = vmatprep.subr.bf16.mxu0 0
    %548 = vmatpush1.bf16.msra.mxu0 %v526
    %549 = vmatprep.subr.bf16.mxu0 0
    %550 = vmatpush1.bf16.msra.mxu0 %v527
    %551 = vmatprep.subr.bf16.mxu0 0
    %552 = vmatpush1.bf16.msra.mxu0 %v528
    %553 = vmatprep.subr.bf16.mxu0 0
    %554 = vmatpush1.bf16.msra.mxu0 0
    %555 = vmatprep.subr.bf16.mxu0 0
    %556 = vmatpush1.bf16.msra.mxu0 0
    %557 = vmatprep.subr.bf16.mxu0 0
    %558 = vmatpush1.bf16.msra.mxu0 0
    %559 = vmatprep.subr.bf16.mxu0 0
    %560 = vmatpush1.bf16.msra.mxu0 0
    %561 = vmatprep.subr.bf16.mxu0 0
    %562 = vmatpush1.bf16.msra.mxu0 0
    %563 = vmatprep.subr.bf16.mxu0 0
    %564 = vmatpush1.bf16.msra.mxu0 0
    %565 = vmatprep.subr.bf16.mxu0 0
    %566 = vmatpush1.bf16.msra.mxu0 0
    %567 = vmatprep.subr.bf16.mxu0 0
    %568 = vmatpush1.bf16.msra.mxu0 0
    %569 = vmatprep.mubr.bf16.mxu0 0
    %570 = vmatmul.mubr.bf16.gmra.mrb[0].mxu0 %v362
    %v571 = vpop.f32.mrb[0].mxu0
    %v572 = vadd.f32 %v484, %v571
    %v573 = vpop.f32.mrb[0].mxu0
    %v574 = vpop.f32.mrb[0].mxu0
    %v575 = vpop.f32.mrb[0].mxu0
    %576 = vdwg.mxu0
    %v577 = vmul.f32 %v361, 5.0
    %v578 = vmul.f32 %v577, %v382
    %v579 = vmul.f32 %v361, 2.0
    %v580 = vsub.f32 %v578, %v579
    %v581 = vmul.f32 %v580, 0.33333334
    %v582 = vpack.c.bf16 %v581, %v581
    %s583 = scalar_lea.vmem %s7, 128
    %v584 = vld [vmem:[%s583] sm:$0xf]
    %v585 = vld [vmem:[%s583 + $0x4] sm:$0xf]
    %v586 = vld [vmem:[%s583 + $0x8] sm:$0xf]
    %v587 = vld [vmem:[%s583 + $0xc] sm:$0xf]
    %v588 = vld [vmem:[%s583 + $0x10] sm:$0xf]
    %v589 = vld [vmem:[%s583 + $0x14] sm:$0xf]
    %v590 = vld [vmem:[%s583 + $0x18] sm:$0xf]
    %v591 = vld [vmem:[%s583 + $0x1c] sm:$0xf]
    %v592 = vld [vmem:[%s583 + $0x20] sm:$0xf]
    %v593 = vld [vmem:[%s583 + $0x24] sm:$0xf]
    %v594 = vld [vmem:[%s583 + $0x28] sm:$0xf]
    %v595 = vld [vmem:[%s583 + $0x2c] sm:$0xf]
    %v596 = vld [vmem:[%s583 + $0x30] sm:$0xf]
    %v597 = vld [vmem:[%s583 + $0x34] sm:$0xf]
    %v598 = vld [vmem:[%s583 + $0x38] sm:$0xf]
    %v599 = vld [vmem:[%s583 + $0x3c] sm:$0xf]
    %v616 = vunpack.c.l.b16 %v584
    %v617 = vunpack.c.l.b16 %v585
    %v618 = vunpack.c.l.b16 %v586
    %v619 = vunpack.c.l.b16 %v587
    %v620 = vunpack.c.l.b16 %v588
    %v621 = vunpack.c.l.b16 %v589
    %v622 = vunpack.c.l.b16 %v590
    %v623 = vunpack.c.l.b16 %v591
    %v624 = vunpack.c.l.b16 %v592
    %v625 = vunpack.c.l.b16 %v593
    %v626 = vunpack.c.l.b16 %v594
    %v627 = vunpack.c.l.b16 %v595
    %v628 = vunpack.c.l.b16 %v596
    %v629 = vunpack.c.l.b16 %v597
    %v630 = vunpack.c.l.b16 %v598
    %v631 = vunpack.c.l.b16 %v599
    %v632 = vpack.c.b16 %v617, %v616
    %v633 = vpack.c.b16 %v619, %v618
    %v634 = vpack.c.b16 %v621, %v620
    %v635 = vpack.c.b16 %v623, %v622
    %v636 = vpack.c.b16 %v625, %v624
    %v637 = vpack.c.b16 %v627, %v626
    %v638 = vpack.c.b16 %v629, %v628
    %v639 = vpack.c.b16 %v631, %v630
    %648 = vmatprep.subr.bf16.mxu0 0
    %649 = vmatpush1.bf16.msra.mxu0 %v632
    %650 = vmatprep.subr.bf16.mxu0 0
    %651 = vmatpush1.bf16.msra.mxu0 %v633
    %652 = vmatprep.subr.bf16.mxu0 0
    %653 = vmatpush1.bf16.msra.mxu0 %v634
    %654 = vmatprep.subr.bf16.mxu0 0
    %655 = vmatpush1.bf16.msra.mxu0 %v635
    %656 = vmatprep.subr.bf16.mxu0 0
    %657 = vmatpush1.bf16.msra.mxu0 %v636
    %658 = vmatprep.subr.bf16.mxu0 0
    %659 = vmatpush1.bf16.msra.mxu0 %v637
    %660 = vmatprep.subr.bf16.mxu0 0
    %661 = vmatpush1.bf16.msra.mxu0 %v638
    %662 = vmatprep.subr.bf16.mxu0 0
    %663 = vmatpush1.bf16.msra.mxu0 %v639
    %664 = vmatprep.subr.bf16.mxu0 0
    %665 = vmatpush1.bf16.msra.mxu0 0
    %666 = vmatprep.subr.bf16.mxu0 0
    %667 = vmatpush1.bf16.msra.mxu0 0
    %668 = vmatprep.subr.bf16.mxu0 0
    %669 = vmatpush1.bf16.msra.mxu0 0
    %670 = vmatprep.subr.bf16.mxu0 0
    %671 = vmatpush1.bf16.msra.mxu0 0
    %672 = vmatprep.subr.bf16.mxu0 0
    %673 = vmatpush1.bf16.msra.mxu0 0
    %674 = vmatprep.subr.bf16.mxu0 0
    %675 = vmatpush1.bf16.msra.mxu0 0
    %676 = vmatprep.subr.bf16.mxu0 0
    %677 = vmatpush1.bf16.msra.mxu0 0
    %678 = vmatprep.subr.bf16.mxu0 0
    %679 = vmatpush1.bf16.msra.mxu0 0
    %680 = vmatprep.mubr.bf16.mxu0 0
    %681 = vmatmul.mubr.bf16.gmra.mrb[0].mxu0 %v582
    %v682 = vpop.f32.mrb[0].mxu0
    %v683 = vadd.f32 0.0, %v682
    %v684 = vpop.f32.mrb[0].mxu0
    %v685 = vpop.f32.mrb[0].mxu0
    %v686 = vpop.f32.mrb[0].mxu0
    %687 = vdwg.mxu0
    %v688 = vadd.f32 %v572, %v683
    %v689 = vld [vmem:[%s8] sm:$0x1]
    %v691 = vlaneseq
    %v692 = vshrl.u32 %v691, 7
    %v693 = vsub.s32 0, %v692
    %v694 = vrot.slane %v689, %v693
    %v696 = vadd.f32 %v688, %v694
    %697 = vadd.xlane.f32.xlu0 %v696
    %v698 = vpop.xlane.xlu0 %697
    %v699 = vmul.f32 %v698, 0.03125
    %v700 = vmul.f32 %v696, %v696
    %701 = vadd.xlane.f32.xlu0 %v700
    %v702 = vpop.xlane.xlu0 %701
    %v703 = vmul.f32 %v702, 0.03125
    %v704 = vmul.f32 %v699, %v699
    %v705 = vsub.f32 %v703, %v704
    %v706 = vmax.f32 %v705, 0.0
    %v707 = vsub.f32 %v696, %v699
    %v708 = vadd.f32 %v706, 1e-05
    %v709 = vrsqrt.pop %v708
    %v710 = vmul.f32 %v707, %v709
    %v711 = vld [vmem:[%s9] sm:$0x1]
    %v713 = vlaneseq
    %v714 = vshrl.u32 %v713, 7
    %v715 = vsub.s32 0, %v714
    %v716 = vrot.slane %v711, %v715
    %v718 = vmul.f32 %v710, %v716
    %v719 = vld [vmem:[%s10] sm:$0x1]
    %v721 = vlaneseq
    %v722 = vshrl.u32 %v721, 7
    %v723 = vsub.s32 0, %v722
    %v724 = vrot.slane %v719, %v723
    %v726 = vadd.f32 %v718, %v724
    %v727 = vmul.f32 %v726, 0.70710677
    %v728 = verf.f32.pop %v727
    %v729 = vpack.c.bf16 %v728, %v728
    %v730 = vld [vmem:[%s11] sm:$0xf]
    %v731 = vld [vmem:[%s11 + $0x4] sm:$0xf]
    %v732 = vld [vmem:[%s11 + $0x8] sm:$0xf]
    %v733 = vld [vmem:[%s11 + $0xc] sm:$0xf]
    %v734 = vld [vmem:[%s11 + $0x10] sm:$0xf]
    %v735 = vld [vmem:[%s11 + $0x14] sm:$0xf]
    %v736 = vld [vmem:[%s11 + $0x18] sm:$0xf]
    %v737 = vld [vmem:[%s11 + $0x1c] sm:$0xf]
    %v738 = vld [vmem:[%s11 + $0x20] sm:$0xf]
    %v739 = vld [vmem:[%s11 + $0x24] sm:$0xf]
    %v740 = vld [vmem:[%s11 + $0x28] sm:$0xf]
    %v741 = vld [vmem:[%s11 + $0x2c] sm:$0xf]
    %v742 = vld [vmem:[%s11 + $0x30] sm:$0xf]
    %v743 = vld [vmem:[%s11 + $0x34] sm:$0xf]
    %v744 = vld [vmem:[%s11 + $0x38] sm:$0xf]
    %v745 = vld [vmem:[%s11 + $0x3c] sm:$0xf]
    %v746 = vmul.f32 %v728, 3.0
    %v747 = vmul.f32 %v746, %v728
    %v748 = vsub.f32 %v747, 1.0
    %v749 = vmul.f32 %v748, 0.5
    %v750 = vpack.c.bf16 %v749, %v749
    %s751 = scalar_lea.vmem %s11, 64
    %v752 = vld [vmem:[%s751] sm:$0xf]
    %v753 = vld [vmem:[%s751 + $0x4] sm:$0xf]
    %v754 = vld [vmem:[%s751 + $0x8] sm:$0xf]
    %v755 = vld [vmem:[%s751 + $0xc] sm:$0xf]
    %v756 = vld [vmem:[%s751 + $0x10] sm:$0xf]
    %v757 = vld [vmem:[%s751 + $0x14] sm:$0xf]
    %v758 = vld [vmem:[%s751 + $0x18] sm:$0xf]
    %v759 = vld [vmem:[%s751 + $0x1c] sm:$0xf]
    %v760 = vld [vmem:[%s751 + $0x20] sm:$0xf]
    %v761 = vld [vmem:[%s751 + $0x24] sm:$0xf]
    %v762 = vld [vmem:[%s751 + $0x28] sm:$0xf]
    %v763 = vld [vmem:[%s751 + $0x2c] sm:$0xf]
    %v764 = vld [vmem:[%s751 + $0x30] sm:$0xf]
    %v765 = vld [vmem:[%s751 + $0x34] sm:$0xf]
    %v766 = vld [vmem:[%s751 + $0x38] sm:$0xf]
    %v767 = vld [vmem:[%s751 + $0x3c] sm:$0xf]
    %v784 = vunpack.c.l.b16 %v752
    %v785 = vunpack.c.l.b16 %v753
    %v786 = vunpack.c.l.b16 %v754
    %v787 = vunpack.c.l.b16 %v755
    %v788 = vunpack.c.l.b16 %v756
    %v789 = vunpack.c.l.b16 %v757
    %v790 = vunpack.c.l.b16 %v758
    %v791 = vunpack.c.l.b16 %v759
    %v792 = vunpack.c.l.b16 %v760
    %v793 = vunpack.c.l.b16 %v761
    %v794 = vunpack.c.l.b16 %v762
    %v795 = vunpack.c.l.b16 %v763
    %v796 = vunpack.c.l.b16 %v764
    %v797 = vunpack.c.l.b16 %v765
    %v798 = vunpack.c.l.b16 %v766
    %v799 = vunpack.c.l.b16 %v767
    %v800 = vpack.c.b16 %v785, %v784
    %v801 = vpack.c.b16 %v787, %v786
    %v802 = vpack.c.b16 %v789, %v788
    %v803 = vpack.c.b16 %v791, %v790
    %v804 = vpack.c.b16 %v793, %v792
    %v805 = vpack.c.b16 %v795, %v794
    %v806 = vpack.c.b16 %v797, %v796
    %v807 = vpack.c.b16 %v799, %v798
    %816 = vmatprep.subr.bf16.mxu0 0
    %817 = vmatpush1.bf16.msra.mxu0 %v800
    %818 = vmatprep.subr.bf16.mxu0 0
    %819 = vmatpush1.bf16.msra.mxu0 %v801
    %820 = vmatprep.subr.bf16.mxu0 0
    %821 = vmatpush1.bf16.msra.mxu0 %v802
    %822 = vmatprep.subr.bf16.mxu0 0
    %823 = vmatpush1.bf16.msra.mxu0 %v803
    %824 = vmatprep.subr.bf16.mxu0 0
    %825 = vmatpush1.bf16.msra.mxu0 %v804
    %826 = vmatprep.subr.bf16.mxu0 0
    %827 = vmatpush1.bf16.msra.mxu0 %v805
    %828 = vmatprep.subr.bf16.mxu0 0
    %829 = vmatpush1.bf16.msra.mxu0 %v806
    %830 = vmatprep.subr.bf16.mxu0 0
    %831 = vmatpush1.bf16.msra.mxu0 %v807
    %832 = vmatprep.subr.bf16.mxu0 0
    %833 = vmatpush1.bf16.msra.mxu0 0
    %834 = vmatprep.subr.bf16.mxu0 0
    %835 = vmatpush1.bf16.msra.mxu0 0
    %836 = vmatprep.subr.bf16.mxu0 0
    %837 = vmatpush1.bf16.msra.mxu0 0
    %838 = vmatprep.subr.bf16.mxu0 0
    %839 = vmatpush1.bf16.msra.mxu0 0
    %840 = vmatprep.subr.bf16.mxu0 0
    %841 = vmatpush1.bf16.msra.mxu0 0
    %842 = vmatprep.subr.bf16.mxu0 0
    %843 = vmatpush1.bf16.msra.mxu0 0
    %844 = vmatprep.subr.bf16.mxu0 0
    %845 = vmatpush1.bf16.msra.mxu0 0
    %846 = vmatprep.subr.bf16.mxu0 0
    %847 = vmatpush1.bf16.msra.mxu0 0
    %848 = vmatprep.mubr.bf16.mxu0 0
    %849 = vmatmul.mubr.bf16.gmra.mrb[0].mxu0 %v750
    %v850 = vpop.f32.mrb[0].mxu0
    %v851 = vadd.f32 0.0, %v850
    %v852 = vpop.f32.mrb[0].mxu0
    %v853 = vpop.f32.mrb[0].mxu0
    %v854 = vpop.f32.mrb[0].mxu0
    %855 = vdwg.mxu0
    %v872 = vunpack.c.l.b16 %v730
    %v873 = vunpack.c.l.b16 %v731
    %v874 = vunpack.c.l.b16 %v732
    %v875 = vunpack.c.l.b16 %v733
    %v876 = vunpack.c.l.b16 %v734
    %v877 = vunpack.c.l.b16 %v735
    %v878 = vunpack.c.l.b16 %v736
    %v879 = vunpack.c.l.b16 %v737
    %v880 = vunpack.c.l.b16 %v738
    %v881 = vunpack.c.l.b16 %v739
    %v882 = vunpack.c.l.b16 %v740
    %v883 = vunpack.c.l.b16 %v741
    %v884 = vunpack.c.l.b16 %v742
    %v885 = vunpack.c.l.b16 %v743
    %v886 = vunpack.c.l.b16 %v744
    %v887 = vunpack.c.l.b16 %v745
    %v888 = vpack.c.b16 %v873, %v872
    %v889 = vpack.c.b16 %v875, %v874
    %v890 = vpack.c.b16 %v877, %v876
    %v891 = vpack.c.b16 %v879, %v878
    %v892 = vpack.c.b16 %v881, %v880
    %v893 = vpack.c.b16 %v883, %v882
    %v894 = vpack.c.b16 %v885, %v884
    %v895 = vpack.c.b16 %v887, %v886
    %904 = vmatprep.subr.bf16.mxu0 0
    %905 = vmatpush1.bf16.msra.mxu0 %v888
    %906 = vmatprep.subr.bf16.mxu0 0
    %907 = vmatpush1.bf16.msra.mxu0 %v889
    %908 = vmatprep.subr.bf16.mxu0 0
    %909 = vmatpush1.bf16.msra.mxu0 %v890
    %910 = vmatprep.subr.bf16.mxu0 0
    %911 = vmatpush1.bf16.msra.mxu0 %v891
    %912 = vmatprep.subr.bf16.mxu0 0
    %913 = vmatpush1.bf16.msra.mxu0 %v892
    %914 = vmatprep.subr.bf16.mxu0 0
    %915 = vmatpush1.bf16.msra.mxu0 %v893
    %916 = vmatprep.subr.bf16.mxu0 0
    %917 = vmatpush1.bf16.msra.mxu0 %v894
    %918 = vmatprep.subr.bf16.mxu0 0
    %919 = vmatpush1.bf16.msra.mxu0 %v895
    %920 = vmatprep.subr.bf16.mxu0 0
    %921 = vmatpush1.bf16.msra.mxu0 0
    %922 = vmatprep.subr.bf16.mxu0 0
    %923 = vmatpush1.bf16.msra.mxu0 0
    %924 = vmatprep.subr.bf16.mxu0 0
    %925 = vmatpush1.bf16.msra.mxu0 0
    %926 = vmatprep.subr.bf16.mxu0 0
    %927 = vmatpush1.bf16.msra.mxu0 0
    %928 = vmatprep.subr.bf16.mxu0 0
    %929 = vmatpush1.bf16.msra.mxu0 0
    %930 = vmatprep.subr.bf16.mxu0 0
    %931 = vmatpush1.bf16.msra.mxu0 0
    %932 = vmatprep.subr.bf16.mxu0 0
    %933 = vmatpush1.bf16.msra.mxu0 0
    %934 = vmatprep.subr.bf16.mxu0 0
    %935 = vmatpush1.bf16.msra.mxu0 0
    %936 = vmatprep.mubr.bf16.mxu0 0
    %937 = vmatmul.mubr.bf16.gmra.mrb[0].mxu0 %v729
    %v938 = vpop.f32.mrb[0].mxu0
    %v939 = vadd.f32 %v851, %v938
    %v940 = vpop.f32.mrb[0].mxu0
    %v941 = vpop.f32.mrb[0].mxu0
    %v942 = vpop.f32.mrb[0].mxu0
    %943 = vdwg.mxu0
    %v944 = vmul.f32 %v728, 5.0
    %v945 = vmul.f32 %v944, %v749
    %v946 = vmul.f32 %v728, 2.0
    %v947 = vsub.f32 %v945, %v946
    %v948 = vmul.f32 %v947, 0.33333334
    %v949 = vpack.c.bf16 %v948, %v948
    %s950 = scalar_lea.vmem %s11, 128
    %v951 = vld [vmem:[%s950] sm:$0xf]
    %v952 = vld [vmem:[%s950 + $0x4] sm:$0xf]
    %v953 = vld [vmem:[%s950 + $0x8] sm:$0xf]
    %v954 = vld [vmem:[%s950 + $0xc] sm:$0xf]
    %v955 = vld [vmem:[%s950 + $0x10] sm:$0xf]
    %v956 = vld [vmem:[%s950 + $0x14] sm:$0xf]
    %v957 = vld [vmem:[%s950 + $0x18] sm:$0xf]
    %v958 = vld [vmem:[%s950 + $0x1c] sm:$0xf]
    %v959 = vld [vmem:[%s950 + $0x20] sm:$0xf]
    %v960 = vld [vmem:[%s950 + $0x24] sm:$0xf]
    %v961 = vld [vmem:[%s950 + $0x28] sm:$0xf]
    %v962 = vld [vmem:[%s950 + $0x2c] sm:$0xf]
    %v963 = vld [vmem:[%s950 + $0x30] sm:$0xf]
    %v964 = vld [vmem:[%s950 + $0x34] sm:$0xf]
    %v965 = vld [vmem:[%s950 + $0x38] sm:$0xf]
    %v966 = vld [vmem:[%s950 + $0x3c] sm:$0xf]
    %v983 = vunpack.c.l.b16 %v951
    %v984 = vunpack.c.l.b16 %v952
    %v985 = vunpack.c.l.b16 %v953
    %v986 = vunpack.c.l.b16 %v954
    %v987 = vunpack.c.l.b16 %v955
    %v988 = vunpack.c.l.b16 %v956
    %v989 = vunpack.c.l.b16 %v957
    %v990 = vunpack.c.l.b16 %v958
    %v991 = vunpack.c.l.b16 %v959
    %v992 = vunpack.c.l.b16 %v960
    %v993 = vunpack.c.l.b16 %v961
    %v994 = vunpack.c.l.b16 %v962
    %v995 = vunpack.c.l.b16 %v963
    %v996 = vunpack.c.l.b16 %v964
    %v997 = vunpack.c.l.b16 %v965
    %v998 = vunpack.c.l.b16 %v966
    %v999 = vpack.c.b16 %v984, %v983
    %v1000 = vpack.c.b16 %v986, %v985
    %v1001 = vpack.c.b16 %v988, %v987
    %v1002 = vpack.c.b16 %v990, %v989
    %v1003 = vpack.c.b16 %v992, %v991
    %v1004 = vpack.c.b16 %v994, %v993
    %v1005 = vpack.c.b16 %v996, %v995
    %v1006 = vpack.c.b16 %v998, %v997
    %1015 = vmatprep.subr.bf16.mxu0 0
    %1016 = vmatpush1.bf16.msra.mxu0 %v999
    %1017 = vmatprep.subr.bf16.mxu0 0
    %1018 = vmatpush1.bf16.msra.mxu0 %v1000
    %1019 = vmatprep.subr.bf16.mxu0 0
    %1020 = vmatpush1.bf16.msra.mxu0 %v1001
    %1021 = vmatprep.subr.bf16.mxu0 0
    %1022 = vmatpush1.bf16.msra.mxu0 %v1002
    %1023 = vmatprep.subr.bf16.mxu0 0
    %1024 = vmatpush1.bf16.msra.mxu0 %v1003
    %1025 = vmatprep.subr.bf16.mxu0 0
    %1026 = vmatpush1.bf16.msra.mxu0 %v1004
    %1027 = vmatprep.subr.bf16.mxu0 0
    %1028 = vmatpush1.bf16.msra.mxu0 %v1005
    %1029 = vmatprep.subr.bf16.mxu0 0
    %1030 = vmatpush1.bf16.msra.mxu0 %v1006
    %1031 = vmatprep.subr.bf16.mxu0 0
    %1032 = vmatpush1.bf16.msra.mxu0 0
    %1033 = vmatprep.subr.bf16.mxu0 0
    %1034 = vmatpush1.bf16.msra.mxu0 0
    %1035 = vmatprep.subr.bf16.mxu0 0
    %1036 = vmatpush1.bf16.msra.mxu0 0
    %1037 = vmatprep.subr.bf16.mxu0 0
    %1038 = vmatpush1.bf16.msra.mxu0 0
    %1039 = vmatprep.subr.bf16.mxu0 0
    %1040 = vmatpush1.bf16.msra.mxu0 0
    %1041 = vmatprep.subr.bf16.mxu0 0
    %1042 = vmatpush1.bf16.msra.mxu0 0
    %1043 = vmatprep.subr.bf16.mxu0 0
    %1044 = vmatpush1.bf16.msra.mxu0 0
    %1045 = vmatprep.subr.bf16.mxu0 0
    %1046 = vmatpush1.bf16.msra.mxu0 0
    %1047 = vmatprep.mubr.bf16.mxu0 0
    %1048 = vmatmul.mubr.bf16.gmra.mrb[0].mxu0 %v949
    %v1049 = vpop.f32.mrb[0].mxu0
    %v1050 = vadd.f32 0.0, %v1049
    %v1051 = vpop.f32.mrb[0].mxu0
    %v1052 = vpop.f32.mrb[0].mxu0
    %v1053 = vpop.f32.mrb[0].mxu0
    %1054 = vdwg.mxu0
    %v1055 = vadd.f32 %v939, %v1050
    %v1056 = vld [vmem:[%s12] sm:$0x1]
    %v1058 = vlaneseq
    %v1059 = vshrl.u32 %v1058, 7
    %v1060 = vsub.s32 0, %v1059
    %v1061 = vrot.slane %v1056, %v1060
    %v1063 = vadd.f32 %v1055, %v1061
    %1064 = vst [vmem:[#allocation2] sm:$0xff] %v1063
    // Predicated region
    $region54: #{qkal_forward.1} parent=1 // pred_check
      _
    $region55: #{qkal_forward.1} parent=1 // pred_check_branch
      %1066 = sbr.rel (0) target = $region57
    $region56: #{qkal_forward.1} parent=1 // pred_region
      %s1068 = ssub.s32 128, 128
      %1069 = vsyncadd [#allocation3], %s1068
      %s1071 = sshll.u32 [#allocation2], 4
      %s1072 = int_to_ptr.vmem [resolvable:$true] %s1071
      %1074 = dma.vmem_to_hbm [thread:$0]  %s1072, 128, %s13, [#allocation3]
    $region57: #{qkal_forward.1} parent=1 // pred_fallthru
      _
    // Predicated region
    $region58: #{qkal_forward.1} parent=1 // pred_check
      _
    $region59: #{qkal_forward.1} parent=1 // pred_check_branch
      %1076 = sbr.rel (0) target = $region61
    $region60: #{qkal_forward.1} parent=1 // pred_region
      %1077 = dma.done [#allocation3], 128
    $region61: #{qkal_forward.1} parent=1 // pred_fallthru
      _
    %1078 = vsyncpa [#allocation3], 1

</llo_original>
